<compile_context>
chip_gen: v7x
topology: tpu7x:2x2x1
jax: 0.10.0
libtpu: 0.0.40
codegen_flags: <defaults>
</compile_context>

<pallas_src>
import functools

import jax
import jax.numpy as jnp
from jax.experimental import pallas as pl
from jax.experimental.pallas import tpu as pltpu


def _round_up(x, m):
    return (x + m - 1) // m * m


def _tensorcore_count():
    # Best-effort: v7x exposes 2 TensorCores per chip, v5e/v6e have 1.
    # Batch-splitting the recurrence on a single-TC chip only serializes it,
    # so default to 1 when the device does not report a core count.
    try:
        return max(1, int(getattr(jax.devices()[0], "num_cores", 1)))
    except Exception:  # pragma: no cover
        return 1


def _repack_gates_rows(w, hidden):
    # PyTorch LSTM gate order along the leading 4H axis is [i, f, g, o];
    # repack to [i, f, o, g] so sigmoid applies to one contiguous 3H slab.
    return jnp.concatenate(
        [w[:hidden], w[hidden:2 * hidden], w[3 * hidden:], w[2 * hidden:3 * hidden]],
        axis=0)


# ---------------------------------------------------------------------------
# Pallas kernels
# ---------------------------------------------------------------------------

def _encoder_kernel(x_ref, w_ref, b_ref, o_ref, *, inv_hw):
    # x_ref: (bn, HW, C) channels-last.  Pool over the sublane (HW) axis so C
    # stays lane-dense, then FC + ReLU.
    pooled = jnp.sum(x_ref[...], axis=1) * inv_hw                          # (bn, C)
    y = jnp.dot(pooled, w_ref[...], preferred_element_type=jnp.float32)    # (bn, E)
    o_ref[...] = jnp.maximum(y + b_ref[...], 0.0).astype(o_ref.dtype)


def _linear_kernel(x_ref, w_ref, b_ref, o_ref, acc_ref):
    # x_ref: (tm, tk) bf16, w_ref: (tk, tn) bf16, b_ref: (1, tn) f32,
    # acc_ref: (tm, tn) f32 accumulator carried over the K ("arbitrary") axis.
    kk = pl.program_id(2)

    @pl.when(kk == 0)
    def _():
        acc_ref[...] = jnp.zeros_like(acc_ref)

    acc_ref[...] += jnp.dot(x_ref[...], w_ref[...],
                            preferred_element_type=jnp.float32)

    @pl.when(kk == pl.num_programs(2) - 1)
    def _():
        o_ref[...] = (acc_ref[...] + b_ref[...]).astype(o_ref.dtype)


def _lstm_recurrence_kernel(gx_ref, whh_ref, o_ref, h_sc, c_sc, *,
                            hidden, tb, seq_len, guard):
    # gx_ref : (tb, bn, 4H) bf16 -- precomputed x@W_ih^T + (b_ih+b_hh), gate
    #                               columns repacked to [i, f, o, g]
    # whh_ref: (H, 4H)      bf16 -- recurrent weight (same gate column order)
    # h_sc   : (bn, H)      bf16 -- hidden carry (f32 math, bf16 storage)
    # c_sc   : (bn, H)      f32  -- cell carry
    #
    # CORRECTNESS NOTE: the h/c carry relies on (a) the time grid axis being
    # the innermost (last) grid axis so it iterates sequentially, and (b) the
    # leading batch-block axis being "parallel" so each TensorCore gets a
    # private copy of the scratch.  Do not reorder the grid or change the
    # dimension_semantics without revisiting this.
    t_blk = pl.program_id(1)

    @pl.when(t_blk == 0)
    def _():
        h_sc[...] = jnp.zeros_like(h_sc)
        c_sc[...] = jnp.zeros_like(c_sc)

    w = whh_ref[...]                       # hoisted: one load per grid step

    def step(tt, carry):
        def body():
            gates = gx_ref[tt] + jnp.dot(h_sc[...], w,
                                         preferred_element_type=jnp.float32)  # (bn, 4H) f32
            # Repacked gate order [i, f, o, g]: one sigmoid over 3H, one tanh.
            ifo = jax.nn.sigmoid(gates[:, :3 * hidden])
            g = jnp.tanh(gates[:, 3 * hidden:])
            i = ifo[:, 0 * hidden:1 * hidden]
            f = ifo[:, 1 * hidden:2 * hidden]
            o = ifo[:, 2 * hidden:3 * hidden]
            c = f * c_sc[...] + i * g
            h_new = o * jnp.tanh(c)
            c_sc[...] = c
            h_sc[...] = h_new.astype(h_sc.dtype)
            o_ref[tt] = h_new.astype(o_ref.dtype)

        if guard:
            # Only generated when the time axis was padded: skip tail steps.
            pl.when(t_blk * tb + tt < seq_len)(body)
        else:
            body()
        return carry

    jax.lax.fori_loop(0, tb, step, 0, unroll=True)


# ---------------------------------------------------------------------------
# Wrappers (pallas_call plumbing)
# ---------------------------------------------------------------------------

def encoder_cnn(images, fc_w, fc_b):
    """images: (N, C, H, W) -> features: (N, embed_size) float32."""
    n, c, h, w = images.shape
    hw = h * w
    embed = fc_w.shape[1]
    # Channels-last so the pooling reduction runs over sublanes, C lane-dense.
    x = images.reshape(n, c, hw).transpose(0, 2, 1)                        # (N, HW, C)

    if n % 64 == 0:
        bn = 64
    elif n % 16 == 0:
        bn = 16
    elif n % 8 == 0:
        bn = 8
    else:
        bn = n

    return pl.pallas_call(
        functools.partial(_encoder_kernel, inv_hw=1.0 / hw),
        out_shape=jax.ShapeDtypeStruct((n, embed), jnp.float32),
        grid=(n // bn,),
        in_specs=[
            pl.BlockSpec((bn, hw, c), lambda i: (i, 0, 0)),
            pl.BlockSpec((c, embed), lambda i: (0, 0)),
            pl.BlockSpec((1, embed), lambda i: (0, 0)),
        ],
        out_specs=pl.BlockSpec((bn, embed), lambda i: (i, 0)),
        compiler_params=pltpu.CompilerParams(dimension_semantics=("parallel",)),
    )(x, fc_w, fc_b.reshape(1, embed))


def linear(x, w, b, *, tm=256, tn=512, tk=512, out_dtype=jnp.float32):
    """Tiled bf16 matmul with f32 accumulation: (M,K) @ (K,Nout) + b.

    Grid order is (N tiles, M tiles, K tiles): K innermost ("arbitrary") for
    the f32 VMEM accumulator, M swept inside each N tile so the W column slab
    is the stationary operand for large-M calls (W streamed once per N tile
    when K fits in one tile).  M / Nout / K are padded to aligned tiles and
    the result is sliced back, so arbitrary shapes are supported while blocks
    stay (sublane, lane) friendly.
    """
    m, k = x.shape
    nout = w.shape[1]

    x16 = x.astype(jnp.bfloat16)
    w16 = w.astype(jnp.bfloat16)
    b32 = b.astype(jnp.float32)

    mp = _round_up(m, 16)            # bf16 sublane packing
    tm = min(tm, mp)
    mp = _round_up(mp, tm)
    np0 = _round_up(nout, 128)       # lane-dense output tiles
    tn = min(tn, np0)
    np_ = _round_up(np0, tn)
    if k <= tk:
        tk = k                       # single K tile (block == full dim)
        kp = k
    else:
        kp = _round_up(k, tk)

    if mp != m or kp != k:
        x16 = jnp.pad(x16, ((0, mp - m), (0, kp - k)))
    if np_ != nout or kp != k:
        w16 = jnp.pad(w16, ((0, kp - k), (0, np_ - nout)))
    if np_ != nout:
        b32 = jnp.pad(b32, ((0, np_ - nout),))

    out = pl.pallas_call(
        _linear_kernel,
        out_shape=jax.ShapeDtypeStruct((mp, np_), out_dtype),
        grid=(np_ // tn, mp // tm, kp // tk),
        in_specs=[
            pl.BlockSpec((tm, tk), lambda j, i, kk: (i, kk)),
            pl.BlockSpec((tk, tn), lambda j, i, kk: (kk, j)),
            pl.BlockSpec((1, tn), lambda j, i, kk: (0, j)),
        ],
        out_specs=pl.BlockSpec((tm, tn), lambda j, i, kk: (i, j)),
        scratch_shapes=[pltpu.VMEM((tm, tn), jnp.float32)],
        compiler_params=pltpu.CompilerParams(
            dimension_semantics=("parallel", "parallel", "arbitrary"),
            vmem_limit_bytes=32 * 1024 * 1024),
    )(x16, w16, b32.reshape(1, -1))
    return out[:m, :nout]


def lstm_layer(x_seq, w_ih, w_hh, b_ih, b_hh, *, tb=32, num_cores=1):
    """One LSTM layer over the whole sequence.

    x_seq: (T, N, E_in); PyTorch weight convention:
      w_ih: (4H, E_in), w_hh: (4H, H), b_ih/b_hh: (4H,).
    Returns (T, N, H) bfloat16 (consumers cast to bf16 anyway).
    """
    t1, n, e_in = x_seq.shape
    h4 = w_ih.shape[0]
    hidden = h4 // 4

    # Host-side gate repack to [i, f, o, g] (applied consistently to W_ih,
    # W_hh and the bias, so the math is unchanged).
    w_ih_r = _repack_gates_rows(w_ih, hidden)
    w_hh_r = _repack_gates_rows(w_hh, hidden)
    bias_r = _repack_gates_rows(b_ih + b_hh, hidden)

    # --- Hoisted input projection: one big tiled MXU matmul over all steps,
    #     stored bf16 (halves HBM writeback + re-read of the largest tensor).
    gates_x = linear(x_seq.reshape(t1 * n, e_in), w_ih_r.T, bias_r,
                     out_dtype=jnp.bfloat16)                      # (T*N, 4H) bf16
    gates_x = gates_x.reshape(t1, n, h4)

    # --- Time blocking: tb serial steps per grid step; pad AFTER the linear
    #     so padded steps never hit the MXU, and guard them in the kernel.
    tb = min(tb, t1)
    t1p = _round_up(t1, tb)
    if t1p != t1:
        gates_x = jnp.pad(gates_x, ((0, t1p - t1), (0, 0), (0, 0)))

    whh_t = w_hh_r.T.astype(jnp.bfloat16)                         # (H, 4H)

    # Batch split only for multi-TensorCore chips (v7x) AND only when each
    # core still gets a full bf16 sublane pack (bn >= 16).  On single-TC
    # v5e/v6e a split just serializes the recurrence (~2x slower).
    bn = n
    if num_cores >= 2 and n >= 32 and n % 32 == 0:
        bn = n // 2
    grid = (n // bn, t1p // tb)   # b outer ("parallel"), t innermost ("arbitrary")

    out = pl.pallas_call(
        functools.partial(_lstm_recurrence_kernel, hidden=hidden, tb=tb,
                          seq_len=t1, guard=(t1p != t1)),
        out_shape=jax.ShapeDtypeStruct((t1p, n, hidden), jnp.bfloat16),
        grid=grid,
        in_specs=[
            pl.BlockSpec((tb, bn, h4), lambda b, t: (t, b, 0)),
            pl.BlockSpec((hidden, h4), lambda b, t: (0, 0)),
        ],
        out_specs=pl.BlockSpec((tb, bn, hidden), lambda b, t: (t, b, 0)),
        scratch_shapes=[
            pltpu.VMEM((bn, hidden), jnp.bfloat16),   # h carry (bf16)
            pltpu.VMEM((bn, hidden), jnp.float32),    # c carry (f32)
        ],
        compiler_params=pltpu.CompilerParams(
            dimension_semantics=("parallel", "arbitrary")),
    )(gates_x, whh_t)
    return out[:t1]


# ---------------------------------------------------------------------------
# CNNtoRNN forward
# ---------------------------------------------------------------------------

def init_params(key, *, in_channels, embed_size, hidden_size, vocab_size, num_layers):
    ks = list(jax.random.split(key, 4 + num_layers))
    p = {}
    p["enc_fc_w"] = 0.1 * jax.random.normal(ks[0], (in_channels, embed_size), jnp.float32)
    p["enc_fc_b"] = 0.1 * jax.random.normal(ks[1], (embed_size,), jnp.float32)
    p["embed"] = 0.1 * jax.random.normal(ks[2], (vocab_size, embed_size), jnp.float32)
    p["lin_w"] = 0.1 * jax.random.normal(ks[3], (hidden_size, vocab_size), jnp.float32)
    p["lin_b"] = jnp.zeros((vocab_size,), jnp.float32)
    p["lstm"] = []
    for layer in range(num_layers):
        e_in = embed_size if layer == 0 else hidden_size
        k0, k1, k2, k3 = jax.random.split(ks[4 + layer], 4)
        p["lstm"].append({
            "w_ih": 0.1 * jax.random.normal(k0, (4 * hidden_size, e_in), jnp.float32),
            "w_hh": 0.1 * jax.random.normal(k1, (4 * hidden_size, hidden_size), jnp.float32),
            "b_ih": 0.1 * jax.random.normal(k2, (4 * hidden_size,), jnp.float32),
            "b_hh": 0.1 * jax.random.normal(k3, (4 * hidden_size,), jnp.float32),
        })
    return p


def cnn_to_rnn_forward(params, images, captions, *, num_cores=None):
    """images: (N, C, H, W) float32; captions: (T, N) int32 -> (T+1, N, vocab) f32."""
    if num_cores is None:
        num_cores = _tensorcore_count()

    # --- EncoderCNN (backbone stand-in + fc + ReLU; dropout = identity) -----
    features = encoder_cnn(images, params["enc_fc_w"], params["enc_fc_b"])   # (N, E)

    # --- DecoderRNN ----------------------------------------------------------
    embeddings = jnp.take(params["embed"], captions, axis=0)                 # (T, N, E)
    seq = jnp.concatenate([features[None], embeddings], axis=0)              # (T+1, N, E)

    h_seq = seq
    for layer_params in params["lstm"]:
        h_seq = lstm_layer(h_seq, layer_params["w_ih"], layer_params["w_hh"],
                           layer_params["b_ih"], layer_params["b_hh"],
                           num_cores=num_cores)                              # (T+1, N, H) bf16

    # Vocab projection: tiled bf16 MXU matmul over all (T+1)*N rows, f32 logits.
    t1, n, hidden = h_seq.shape
    logits = linear(h_seq.reshape(t1 * n, hidden), params["lin_w"], params["lin_b"],
                    out_dtype=jnp.float32)
    return logits.reshape(t1, n, params["lin_w"].shape[1])                   # (T+1, N, V)


# ---------------------------------------------------------------------------
# Pure-JAX f32 reference (same semantics) for a loose numerical sanity check.
# ---------------------------------------------------------------------------

def reference_forward(params, images, captions):
    n, c, h, w = images.shape
    pooled = images.reshape(n, c, h * w).mean(axis=2)
    feats = jax.nn.relu(pooled @ params["enc_fc_w"] + params["enc_fc_b"])
    emb = jnp.take(params["embed"], captions, axis=0)
    x = jnp.concatenate([feats[None], emb], axis=0)
    hidden = params["lstm"][0]["w_hh"].shape[1]
    for lp in params["lstm"]:
        t1, nb, _ = x.shape
        hprev = jnp.zeros((nb, hidden), jnp.float32)
        cprev = jnp.zeros((nb, hidden), jnp.float32)
        outs = []
        for t in range(t1):
            gates = x[t] @ lp["w_ih"].T + hprev @ lp["w_hh"].T + lp["b_ih"] + lp["b_hh"]
            i = jax.nn.sigmoid(gates[:, 0 * hidden:1 * hidden])
            f = jax.nn.sigmoid(gates[:, 1 * hidden:2 * hidden])
            g = jnp.tanh(gates[:, 2 * hidden:3 * hidden])
            o = jax.nn.sigmoid(gates[:, 3 * hidden:4 * hidden])
            cprev = f * cprev + i * g
            hprev = o * jnp.tanh(cprev)
            outs.append(hprev)
        x = jnp.stack(outs, axis=0)
    return x @ params["lin_w"] + params["lin_b"]


# ---------------------------------------------------------------------------
# Demo
# ---------------------------------------------------------------------------

if __name__ == "__main__":
    key = jax.random.PRNGKey(0)
    k_img, k_cap, k_par = jax.random.split(key, 3)

    # Small but layout-friendly shapes (hidden/embed multiples of 128,
    # batch=16 so bf16 intermediates are fully sublane-packed).
    batch, channels, spatial = 16, 4, 16
    seq_len = 8
    embed_size, hidden_size, vocab_size, num_layers = 128, 128, 256, 2

    images = jax.random.normal(k_img, (batch, channels, spatial, spatial), jnp.float32)
    captions = jax.random.randint(k_cap, (seq_len, batch), 0, vocab_size, jnp.int32)

    params = init_params(k_par, in_channels=channels, embed_size=embed_size,
                         hidden_size=hidden_size, vocab_size=vocab_size,
                         num_layers=num_layers)

    out = cnn_to_rnn_forward(params, images, captions)
    out = jax.block_until_ready(out)

    assert out.shape == (seq_len + 1, batch, vocab_size), out.shape
    assert bool(jnp.all(jnp.isfinite(out)))

    # Loose tolerance: bf16 matmul operands + bf16 intermediates (gates_x,
    # hidden sequence) with f32 accumulation and f32 cell carry.
    ref = reference_forward(params, images, captions)
    max_err = float(jnp.max(jnp.abs(out - ref)))
    assert max_err < 0.2, f"max abs error vs f32 reference too large: {max_err}"

    print("KERNEL_OK")
</pallas_src>

<mosaic_0001>
module attributes {stable_mosaic.version = 11 : i64} {
  func.func @_encoder_kernel(%arg0: i32, %arg1: memref<16x256x4xf32, #tpu.memory_space<vmem>>, %arg2: memref<4x128xf32, #tpu.memory_space<vmem>>, %arg3: memref<1x128xf32, #tpu.memory_space<vmem>>, %arg4: memref<16x128xf32, #tpu.memory_space<vmem>>) attributes {dimension_semantics = [#tpu.dimension_semantics<parallel>], iteration_bounds = array<i64: 1>, scalar_prefetch = 0 : i64, scratch_operands = 0 : i64, tpu.core_type = #tpu.core_type<tc>, window_params = [{transform_indices = @transform_0, window_bounds = array<i64: 16, 256, 4>}, {pipeline_mode = #tpu.pipeline_mode<synchronous>, transform_indices = @transform_1, window_bounds = array<i64: 4, 128>}, {pipeline_mode = #tpu.pipeline_mode<synchronous>, transform_indices = @transform_2, window_bounds = array<i64: 1, 128>}, {transform_indices = @transform_3, window_bounds = array<i64: 16, 128>}]} {
    %c0 = arith.constant 0 : index
    %c0_0 = arith.constant 0 : index
    %c0_1 = arith.constant 0 : index
    %0 = vector.load %arg1[%c0, %c0_0, %c0_1] : memref<16x256x4xf32, #tpu.memory_space<vmem>>, vector<16x256x4xf32>
    %cst = arith.constant dense<0.000000e+00> : vector<16x4xf32>
    %1 = vector.multi_reduction <add>, %0, %cst [1] : vector<16x256x4xf32> to vector<16x4xf32>
    %cst_2 = arith.constant 3.906250e-03 : f32
    %2 = vector.broadcast %cst_2 : f32 to vector<16x4xf32>
    %3 = arith.mulf %1, %2 : vector<16x4xf32>
    %c0_3 = arith.constant 0 : index
    %c0_4 = arith.constant 0 : index
    %4 = vector.load %arg2[%c0_3, %c0_4] : memref<4x128xf32, #tpu.memory_space<vmem>>, vector<4x128xf32>
    %cst_5 = arith.constant dense<0.000000e+00> : vector<16x128xf32>
    %5 = tpu.matmul %3, %4, %cst_5 {dimension_numbers = #tpu.dot_dimension_numbers<[1], [0], [0], [1], [0, 0, 1, 1], [], []>} : vector<16x4xf32>, vector<4x128xf32>, vector<16x128xf32> -> vector<16x128xf32>
    %c0_6 = arith.constant 0 : index
    %c0_7 = arith.constant 0 : index
    %6 = vector.load %arg3[%c0_6, %c0_7] : memref<1x128xf32, #tpu.memory_space<vmem>>, vector<1x128xf32>
    %7 = vector.broadcast %6 : vector<1x128xf32> to vector<16x128xf32>
    %8 = arith.addf %5, %7 : vector<16x128xf32>
    %cst_8 = arith.constant 0.000000e+00 : f32
    %9 = vector.broadcast %cst_8 : f32 to vector<16x128xf32>
    %10 = arith.maximumf %8, %9 : vector<16x128xf32>
    %c0_9 = arith.constant 0 : index
    %c0_10 = arith.constant 0 : index
    %11 = vector.load %arg4[%c0_9, %c0_10] : memref<16x128xf32, #tpu.memory_space<vmem>>, vector<16x128xf32>
    tpu.vector_store %arg4[%c0_9, %c0_10], %10 {strides = array<i32>} : memref<16x128xf32, #tpu.memory_space<vmem>>, vector<16x128xf32>,
    return
  }
  func.func @transform_0(%arg0: i32) -> (i32, i32, i32) {
    %c0_i32 = arith.constant 0 : i32
    %c0_i32_0 = arith.constant 0 : i32
    %c0_i32_1 = arith.constant 0 : i32
    return %arg0, %c0_i32, %c0_i32_0 : i32, i32, i32
  }
  func.func @transform_1(%arg0: i32) -> (i32, i32) {
    %c0_i32 = arith.constant 0 : i32
    %c0_i32_0 = arith.constant 0 : i32
    %c0_i32_1 = arith.constant 0 : i32
    return %c0_i32, %c0_i32_0 : i32, i32
  }
  func.func @transform_2(%arg0: i32) -> (i32, i32) {
    %c0_i32 = arith.constant 0 : i32
    %c0_i32_0 = arith.constant 0 : i32
    %c0_i32_1 = arith.constant 0 : i32
    return %c0_i32, %c0_i32_0 : i32, i32
  }
  func.func @transform_3(%arg0: i32) -> (i32, i32) {
    %c0_i32 = arith.constant 0 : i32
    %c0_i32_0 = arith.constant 0 : i32
    return %arg0, %c0_i32 : i32, i32
  }
}

</mosaic_0001>

<llo_original>
// kernel: tpu_custom_call.1
$region0: #{tpu_custom_call.1}
  #allocation0 [shape = 'u32[]', space=smem, size = 0x4, offset = 0x4, fixed_abs, tag = 'smem constant byte address 0x4 - core index']
  #allocation1 [shape = 'u32[144,128]{1,0:T(1,128)}', space=vmem, size = 0x12000, scoped, tag = 'internal scratch']
  %s0 = inlined_call_operand.vmem [shape: f32[16,256,4], index: 0, kind: input, shape index: {}]
  %s1 = inlined_call_operand.vmem [shape: f32[4,128], index: 1, kind: input, shape index: {}]
  %s2 = inlined_call_operand.vmem [shape: f32[1,128], index: 2, kind: input, shape index: {}]
  %s3 = inlined_call_operand.hbm [shape: f32[16,128], index: 3, kind: output, shape index: {}]
  %s4 = sld [smem:[#allocation0]]
  $region22: #{tpu_custom_call.1} parent=0
    _
  %s6 = ssub.s32 1, %s4
  %s7 = scalar_select 0, %s6, %s4
  $region1: #{tpu_custom_call.1} parent=0
    #allocation2 [shape = 'u8[8192]{0}', space=vmem, size = 0x2000, scoped, tag = 'output window, operand 0, single buffered']
    #allocation3 [shape = 's32[1]{0}', space=sflag, size = 0x4, scoped, tag = 'scoped memory for tpu_custom_call.1']
    %8 = vsyncpa [#allocation3], 0
    // Predicated region
    $region2: #{tpu_custom_call.1} parent=1 // pred_check
      _
    $region3: #{tpu_custom_call.1} parent=1 // pred_check_branch
      %10 = sbr.rel (0) target = $region5
    $region4: #{tpu_custom_call.1} parent=1 // pred_region
      _
    $region5: #{tpu_custom_call.1} parent=1 // pred_fallthru
      _
    // Predicated region
    $region6: #{tpu_custom_call.1} parent=1 // pred_check
      _
    $region7: #{tpu_custom_call.1} parent=1 // pred_check_branch
      %12 = sbr.rel (0) target = $region9
    $region8: #{tpu_custom_call.1} parent=1 // pred_region
      _
    $region9: #{tpu_custom_call.1} parent=1 // pred_fallthru
      _
    // Predicated region
    $region10: #{tpu_custom_call.1} parent=1 // pred_check
      _
    $region11: #{tpu_custom_call.1} parent=1 // pred_check_branch
      %14 = sbr.rel (0) target = $region13
    $region12: #{tpu_custom_call.1} parent=1 // pred_region
      _
    $region13: #{tpu_custom_call.1} parent=1 // pred_fallthru
      _
    %v15 = vld [vmem:[%s0] sm:$0xff]
    %v16 = vld [vmem:[%s0 + $0x8] sm:$0xff]
    %v17 = vld [vmem:[%s0 + $0x10] sm:$0xff]
    %v18 = vld [vmem:[%s0 + $0x18] sm:$0xff]
    %v19 = vld [vmem:[%s0 + $0x20] sm:$0xff]
    %v20 = vld [vmem:[%s0 + $0x28] sm:$0xff]
    %v21 = vld [vmem:[%s0 + $0x30] sm:$0xff]
    %v22 = vld [vmem:[%s0 + $0x38] sm:$0xff]
    %v23 = vld [vmem:[%s0 + $0x40] sm:$0xff]
    %v24 = vld [vmem:[%s0 + $0x48] sm:$0xff]
    %v25 = vld [vmem:[%s0 + $0x50] sm:$0xff]
    %v26 = vld [vmem:[%s0 + $0x58] sm:$0xff]
    %v27 = vld [vmem:[%s0 + $0x60] sm:$0xff]
    %v28 = vld [vmem:[%s0 + $0x68] sm:$0xff]
    %v29 = vld [vmem:[%s0 + $0x70] sm:$0xff]
    %v30 = vld [vmem:[%s0 + $0x78] sm:$0xff]
    %v31 = vld [vmem:[%s0 + $0x80] sm:$0xff]
    %v32 = vld [vmem:[%s0 + $0x88] sm:$0xff]
    %v33 = vld [vmem:[%s0 + $0x90] sm:$0xff]
    %v34 = vld [vmem:[%s0 + $0x98] sm:$0xff]
    %v35 = vld [vmem:[%s0 + $0xa0] sm:$0xff]
    %v36 = vld [vmem:[%s0 + $0xa8] sm:$0xff]
    %v37 = vld [vmem:[%s0 + $0xb0] sm:$0xff]
    %v38 = vld [vmem:[%s0 + $0xb8] sm:$0xff]
    %v39 = vld [vmem:[%s0 + $0xc0] sm:$0xff]
    %v40 = vld [vmem:[%s0 + $0xc8] sm:$0xff]
    %v41 = vld [vmem:[%s0 + $0xd0] sm:$0xff]
    %v42 = vld [vmem:[%s0 + $0xd8] sm:$0xff]
    %v43 = vld [vmem:[%s0 + $0xe0] sm:$0xff]
    %v44 = vld [vmem:[%s0 + $0xe8] sm:$0xff]
    %v45 = vld [vmem:[%s0 + $0xf0] sm:$0xff]
    %v46 = vld [vmem:[%s0 + $0xf8] sm:$0xff]
    %v47 = vld [vmem:[%s0 + $0x100] sm:$0xff]
    %v48 = vld [vmem:[%s0 + $0x108] sm:$0xff]
    %v49 = vld [vmem:[%s0 + $0x110] sm:$0xff]
    %v50 = vld [vmem:[%s0 + $0x118] sm:$0xff]
    %v51 = vld [vmem:[%s0 + $0x120] sm:$0xff]
    %v52 = vld [vmem:[%s0 + $0x128] sm:$0xff]
    %v53 = vld [vmem:[%s0 + $0x130] sm:$0xff]
    %v54 = vld [vmem:[%s0 + $0x138] sm:$0xff]
    %v55 = vld [vmem:[%s0 + $0x140] sm:$0xff]
    %v56 = vld [vmem:[%s0 + $0x148] sm:$0xff]
    %v57 = vld [vmem:[%s0 + $0x150] sm:$0xff]
    %v58 = vld [vmem:[%s0 + $0x158] sm:$0xff]
    %v59 = vld [vmem:[%s0 + $0x160] sm:$0xff]
    %v60 = vld [vmem:[%s0 + $0x168] sm:$0xff]
    %v61 = vld [vmem:[%s0 + $0x170] sm:$0xff]
    %v62 = vld [vmem:[%s0 + $0x178] sm:$0xff]
    %v63 = vld [vmem:[%s0 + $0x180] sm:$0xff]
    %v64 = vld [vmem:[%s0 + $0x188] sm:$0xff]
    %v65 = vld [vmem:[%s0 + $0x190] sm:$0xff]
    %v66 = vld [vmem:[%s0 + $0x198] sm:$0xff]
    %v67 = vld [vmem:[%s0 + $0x1a0] sm:$0xff]
    %v68 = vld [vmem:[%s0 + $0x1a8] sm:$0xff]
    %v69 = vld [vmem:[%s0 + $0x1b0] sm:$0xff]
    %v70 = vld [vmem:[%s0 + $0x1b8] sm:$0xff]
    %v71 = vld [vmem:[%s0 + $0x1c0] sm:$0xff]
    %v72 = vld [vmem:[%s0 + $0x1c8] sm:$0xff]
    %v73 = vld [vmem:[%s0 + $0x1d0] sm:$0xff]
    %v74 = vld [vmem:[%s0 + $0x1d8] sm:$0xff]
    %v75 = vld [vmem:[%s0 + $0x1e0] sm:$0xff]
    %v76 = vld [vmem:[%s0 + $0x1e8] sm:$0xff]
    %v77 = vld [vmem:[%s0 + $0x1f0] sm:$0xff]
    %v78 = vld [vmem:[%s0 + $0x1f8] sm:$0xff]
    %v79 = vld [vmem:[%s0 + $0x200] sm:$0xff]
    %v80 = vld [vmem:[%s0 + $0x208] sm:$0xff]
    %v81 = vld [vmem:[%s0 + $0x210] sm:$0xff]
    %v82 = vld [vmem:[%s0 + $0x218] sm:$0xff]
    %v83 = vld [vmem:[%s0 + $0x220] sm:$0xff]
    %v84 = vld [vmem:[%s0 + $0x228] sm:$0xff]
    %v85 = vld [vmem:[%s0 + $0x230] sm:$0xff]
    %v86 = vld [vmem:[%s0 + $0x238] sm:$0xff]
    %v87 = vld [vmem:[%s0 + $0x240] sm:$0xff]
    %v88 = vld [vmem:[%s0 + $0x248] sm:$0xff]
    %v89 = vld [vmem:[%s0 + $0x250] sm:$0xff]
    %v90 = vld [vmem:[%s0 + $0x258] sm:$0xff]
    %v91 = vld [vmem:[%s0 + $0x260] sm:$0xff]
    %v92 = vld [vmem:[%s0 + $0x268] sm:$0xff]
    %v93 = vld [vmem:[%s0 + $0x270] sm:$0xff]
    %v94 = vld [vmem:[%s0 + $0x278] sm:$0xff]
    %v95 = vld [vmem:[%s0 + $0x280] sm:$0xff]
    %v96 = vld [vmem:[%s0 + $0x288] sm:$0xff]
    %v97 = vld [vmem:[%s0 + $0x290] sm:$0xff]
    %v98 = vld [vmem:[%s0 + $0x298] sm:$0xff]
    %v99 = vld [vmem:[%s0 + $0x2a0] sm:$0xff]
    %v100 = vld [vmem:[%s0 + $0x2a8] sm:$0xff]
    %v101 = vld [vmem:[%s0 + $0x2b0] sm:$0xff]
    %v102 = vld [vmem:[%s0 + $0x2b8] sm:$0xff]
    %v103 = vld [vmem:[%s0 + $0x2c0] sm:$0xff]
    %v104 = vld [vmem:[%s0 + $0x2c8] sm:$0xff]
    %v105 = vld [vmem:[%s0 + $0x2d0] sm:$0xff]
    %v106 = vld [vmem:[%s0 + $0x2d8] sm:$0xff]
    %v107 = vld [vmem:[%s0 + $0x2e0] sm:$0xff]
    %v108 = vld [vmem:[%s0 + $0x2e8] sm:$0xff]
    %v109 = vld [vmem:[%s0 + $0x2f0] sm:$0xff]
    %v110 = vld [vmem:[%s0 + $0x2f8] sm:$0xff]
    %v111 = vld [vmem:[%s0 + $0x300] sm:$0xff]
    %v112 = vld [vmem:[%s0 + $0x308] sm:$0xff]
    %v113 = vld [vmem:[%s0 + $0x310] sm:$0xff]
    %v114 = vld [vmem:[%s0 + $0x318] sm:$0xff]
    %v115 = vld [vmem:[%s0 + $0x320] sm:$0xff]
    %v116 = vld [vmem:[%s0 + $0x328] sm:$0xff]
    %v117 = vld [vmem:[%s0 + $0x330] sm:$0xff]
    %v118 = vld [vmem:[%s0 + $0x338] sm:$0xff]
    %v119 = vld [vmem:[%s0 + $0x340] sm:$0xff]
    %v120 = vld [vmem:[%s0 + $0x348] sm:$0xff]
    %v121 = vld [vmem:[%s0 + $0x350] sm:$0xff]
    %v122 = vld [vmem:[%s0 + $0x358] sm:$0xff]
    %v123 = vld [vmem:[%s0 + $0x360] sm:$0xff]
    %v124 = vld [vmem:[%s0 + $0x368] sm:$0xff]
    %v125 = vld [vmem:[%s0 + $0x370] sm:$0xff]
    %v126 = vld [vmem:[%s0 + $0x378] sm:$0xff]
    %v127 = vld [vmem:[%s0 + $0x380] sm:$0xff]
    %v128 = vld [vmem:[%s0 + $0x388] sm:$0xff]
    %v129 = vld [vmem:[%s0 + $0x390] sm:$0xff]
    %v130 = vld [vmem:[%s0 + $0x398] sm:$0xff]
    %v131 = vld [vmem:[%s0 + $0x3a0] sm:$0xff]
    %v132 = vld [vmem:[%s0 + $0x3a8] sm:$0xff]
    %v133 = vld [vmem:[%s0 + $0x3b0] sm:$0xff]
    %v134 = vld [vmem:[%s0 + $0x3b8] sm:$0xff]
    %v135 = vld [vmem:[%s0 + $0x3c0] sm:$0xff]
    %v136 = vld [vmem:[%s0 + $0x3c8] sm:$0xff]
    %v137 = vld [vmem:[%s0 + $0x3d0] sm:$0xff]
    %v138 = vld [vmem:[%s0 + $0x3d8] sm:$0xff]
    %v139 = vld [vmem:[%s0 + $0x3e0] sm:$0xff]
    %v140 = vld [vmem:[%s0 + $0x3e8] sm:$0xff]
    %v141 = vld [vmem:[%s0 + $0x3f0] sm:$0xff]
    %v142 = vld [vmem:[%s0 + $0x3f8] sm:$0xff]
    %v143 = vld [vmem:[%s0 + $0x400] sm:$0xff]
    %v144 = vld [vmem:[%s0 + $0x408] sm:$0xff]
    %v145 = vld [vmem:[%s0 + $0x410] sm:$0xff]
    %v146 = vld [vmem:[%s0 + $0x418] sm:$0xff]
    %v147 = vld [vmem:[%s0 + $0x420] sm:$0xff]
    %v148 = vld [vmem:[%s0 + $0x428] sm:$0xff]
    %v149 = vld [vmem:[%s0 + $0x430] sm:$0xff]
    %v150 = vld [vmem:[%s0 + $0x438] sm:$0xff]
    %v151 = vld [vmem:[%s0 + $0x440] sm:$0xff]
    %v152 = vld [vmem:[%s0 + $0x448] sm:$0xff]
    %v153 = vld [vmem:[%s0 + $0x450] sm:$0xff]
    %v154 = vld [vmem:[%s0 + $0x458] sm:$0xff]
    %v155 = vld [vmem:[%s0 + $0x460] sm:$0xff]
    %v156 = vld [vmem:[%s0 + $0x468] sm:$0xff]
    %v157 = vld [vmem:[%s0 + $0x470] sm:$0xff]
    %v158 = vld [vmem:[%s0 + $0x478] sm:$0xff]
    %v159 = vld [vmem:[%s0 + $0x480] sm:$0xff]
    %v160 = vld [vmem:[%s0 + $0x488] sm:$0xff]
    %v161 = vld [vmem:[%s0 + $0x490] sm:$0xff]
    %v162 = vld [vmem:[%s0 + $0x498] sm:$0xff]
    %v163 = vld [vmem:[%s0 + $0x4a0] sm:$0xff]
    %v164 = vld [vmem:[%s0 + $0x4a8] sm:$0xff]
    %v165 = vld [vmem:[%s0 + $0x4b0] sm:$0xff]
    %v166 = vld [vmem:[%s0 + $0x4b8] sm:$0xff]
    %v167 = vld [vmem:[%s0 + $0x4c0] sm:$0xff]
    %v168 = vld [vmem:[%s0 + $0x4c8] sm:$0xff]
    %v169 = vld [vmem:[%s0 + $0x4d0] sm:$0xff]
    %v170 = vld [vmem:[%s0 + $0x4d8] sm:$0xff]
    %v171 = vld [vmem:[%s0 + $0x4e0] sm:$0xff]
    %v172 = vld [vmem:[%s0 + $0x4e8] sm:$0xff]
    %v173 = vld [vmem:[%s0 + $0x4f0] sm:$0xff]
    %v174 = vld [vmem:[%s0 + $0x4f8] sm:$0xff]
    %v175 = vld [vmem:[%s0 + $0x500] sm:$0xff]
    %v176 = vld [vmem:[%s0 + $0x508] sm:$0xff]
    %v177 = vld [vmem:[%s0 + $0x510] sm:$0xff]
    %v178 = vld [vmem:[%s0 + $0x518] sm:$0xff]
    %v179 = vld [vmem:[%s0 + $0x520] sm:$0xff]
    %v180 = vld [vmem:[%s0 + $0x528] sm:$0xff]
    %v181 = vld [vmem:[%s0 + $0x530] sm:$0xff]
    %v182 = vld [vmem:[%s0 + $0x538] sm:$0xff]
    %v183 = vld [vmem:[%s0 + $0x540] sm:$0xff]
    %v184 = vld [vmem:[%s0 + $0x548] sm:$0xff]
    %v185 = vld [vmem:[%s0 + $0x550] sm:$0xff]
    %v186 = vld [vmem:[%s0 + $0x558] sm:$0xff]
    %v187 = vld [vmem:[%s0 + $0x560] sm:$0xff]
    %v188 = vld [vmem:[%s0 + $0x568] sm:$0xff]
    %v189 = vld [vmem:[%s0 + $0x570] sm:$0xff]
    %v190 = vld [vmem:[%s0 + $0x578] sm:$0xff]
    %v191 = vld [vmem:[%s0 + $0x580] sm:$0xff]
    %v192 = vld [vmem:[%s0 + $0x588] sm:$0xff]
    %v193 = vld [vmem:[%s0 + $0x590] sm:$0xff]
    %v194 = vld [vmem:[%s0 + $0x598] sm:$0xff]
    %v195 = vld [vmem:[%s0 + $0x5a0] sm:$0xff]
    %v196 = vld [vmem:[%s0 + $0x5a8] sm:$0xff]
    %v197 = vld [vmem:[%s0 + $0x5b0] sm:$0xff]
    %v198 = vld [vmem:[%s0 + $0x5b8] sm:$0xff]
    %v199 = vld [vmem:[%s0 + $0x5c0] sm:$0xff]
    %v200 = vld [vmem:[%s0 + $0x5c8] sm:$0xff]
    %v201 = vld [vmem:[%s0 + $0x5d0] sm:$0xff]
    %v202 = vld [vmem:[%s0 + $0x5d8] sm:$0xff]
    %v203 = vld [vmem:[%s0 + $0x5e0] sm:$0xff]
    %v204 = vld [vmem:[%s0 + $0x5e8] sm:$0xff]
    %v205 = vld [vmem:[%s0 + $0x5f0] sm:$0xff]
    %v206 = vld [vmem:[%s0 + $0x5f8] sm:$0xff]
    %v207 = vld [vmem:[%s0 + $0x600] sm:$0xff]
    %v208 = vld [vmem:[%s0 + $0x608] sm:$0xff]
    %v209 = vld [vmem:[%s0 + $0x610] sm:$0xff]
    %v210 = vld [vmem:[%s0 + $0x618] sm:$0xff]
    %v211 = vld [vmem:[%s0 + $0x620] sm:$0xff]
    %v212 = vld [vmem:[%s0 + $0x628] sm:$0xff]
    %v213 = vld [vmem:[%s0 + $0x630] sm:$0xff]
    %v214 = vld [vmem:[%s0 + $0x638] sm:$0xff]
    %v215 = vld [vmem:[%s0 + $0x640] sm:$0xff]
    %v216 = vld [vmem:[%s0 + $0x648] sm:$0xff]
    %v217 = vld [vmem:[%s0 + $0x650] sm:$0xff]
    %v218 = vld [vmem:[%s0 + $0x658] sm:$0xff]
    %v219 = vld [vmem:[%s0 + $0x660] sm:$0xff]
    %v220 = vld [vmem:[%s0 + $0x668] sm:$0xff]
    %v221 = vld [vmem:[%s0 + $0x670] sm:$0xff]
    %v222 = vld [vmem:[%s0 + $0x678] sm:$0xff]
    %v223 = vld [vmem:[%s0 + $0x680] sm:$0xff]
    %v224 = vld [vmem:[%s0 + $0x688] sm:$0xff]
    %v225 = vld [vmem:[%s0 + $0x690] sm:$0xff]
    %v226 = vld [vmem:[%s0 + $0x698] sm:$0xff]
    %v227 = vld [vmem:[%s0 + $0x6a0] sm:$0xff]
    %v228 = vld [vmem:[%s0 + $0x6a8] sm:$0xff]
    %v229 = vld [vmem:[%s0 + $0x6b0] sm:$0xff]
    %v230 = vld [vmem:[%s0 + $0x6b8] sm:$0xff]
    %v231 = vld [vmem:[%s0 + $0x6c0] sm:$0xff]
    %v232 = vld [vmem:[%s0 + $0x6c8] sm:$0xff]
    %v233 = vld [vmem:[%s0 + $0x6d0] sm:$0xff]
    %v234 = vld [vmem:[%s0 + $0x6d8] sm:$0xff]
    %v235 = vld [vmem:[%s0 + $0x6e0] sm:$0xff]
    %v236 = vld [vmem:[%s0 + $0x6e8] sm:$0xff]
    %v237 = vld [vmem:[%s0 + $0x6f0] sm:$0xff]
    %v238 = vld [vmem:[%s0 + $0x6f8] sm:$0xff]
    %v239 = vld [vmem:[%s0 + $0x700] sm:$0xff]
    %v240 = vld [vmem:[%s0 + $0x708] sm:$0xff]
    %v241 = vld [vmem:[%s0 + $0x710] sm:$0xff]
    %v242 = vld [vmem:[%s0 + $0x718] sm:$0xff]
    %v243 = vld [vmem:[%s0 + $0x720] sm:$0xff]
    %v244 = vld [vmem:[%s0 + $0x728] sm:$0xff]
    %v245 = vld [vmem:[%s0 + $0x730] sm:$0xff]
    %v246 = vld [vmem:[%s0 + $0x738] sm:$0xff]
    %v247 = vld [vmem:[%s0 + $0x740] sm:$0xff]
    %v248 = vld [vmem:[%s0 + $0x748] sm:$0xff]
    %v249 = vld [vmem:[%s0 + $0x750] sm:$0xff]
    %v250 = vld [vmem:[%s0 + $0x758] sm:$0xff]
    %v251 = vld [vmem:[%s0 + $0x760] sm:$0xff]
    %v252 = vld [vmem:[%s0 + $0x768] sm:$0xff]
    %v253 = vld [vmem:[%s0 + $0x770] sm:$0xff]
    %v254 = vld [vmem:[%s0 + $0x778] sm:$0xff]
    %v255 = vld [vmem:[%s0 + $0x780] sm:$0xff]
    %v256 = vld [vmem:[%s0 + $0x788] sm:$0xff]
    %v257 = vld [vmem:[%s0 + $0x790] sm:$0xff]
    %v258 = vld [vmem:[%s0 + $0x798] sm:$0xff]
    %v259 = vld [vmem:[%s0 + $0x7a0] sm:$0xff]
    %v260 = vld [vmem:[%s0 + $0x7a8] sm:$0xff]
    %v261 = vld [vmem:[%s0 + $0x7b0] sm:$0xff]
    %v262 = vld [vmem:[%s0 + $0x7b8] sm:$0xff]
    %v263 = vld [vmem:[%s0 + $0x7c0] sm:$0xff]
    %v264 = vld [vmem:[%s0 + $0x7c8] sm:$0xff]
    %v265 = vld [vmem:[%s0 + $0x7d0] sm:$0xff]
    %v266 = vld [vmem:[%s0 + $0x7d8] sm:$0xff]
    %v267 = vld [vmem:[%s0 + $0x7e0] sm:$0xff]
    %v268 = vld [vmem:[%s0 + $0x7e8] sm:$0xff]
    %v269 = vld [vmem:[%s0 + $0x7f0] sm:$0xff]
    %v270 = vld [vmem:[%s0 + $0x7f8] sm:$0xff]
    %v271 = vld [vmem:[%s0 + $0x800] sm:$0xff]
    %v272 = vld [vmem:[%s0 + $0x808] sm:$0xff]
    %v273 = vld [vmem:[%s0 + $0x810] sm:$0xff]
    %v274 = vld [vmem:[%s0 + $0x818] sm:$0xff]
    %v275 = vld [vmem:[%s0 + $0x820] sm:$0xff]
    %v276 = vld [vmem:[%s0 + $0x828] sm:$0xff]
    %v277 = vld [vmem:[%s0 + $0x830] sm:$0xff]
    %v278 = vld [vmem:[%s0 + $0x838] sm:$0xff]
    %v279 = vld [vmem:[%s0 + $0x840] sm:$0xff]
    %v280 = vld [vmem:[%s0 + $0x848] sm:$0xff]
    %v281 = vld [vmem:[%s0 + $0x850] sm:$0xff]
    %v282 = vld [vmem:[%s0 + $0x858] sm:$0xff]
    %v283 = vld [vmem:[%s0 + $0x860] sm:$0xff]
    %v284 = vld [vmem:[%s0 + $0x868] sm:$0xff]
    %v285 = vld [vmem:[%s0 + $0x870] sm:$0xff]
    %v286 = vld [vmem:[%s0 + $0x878] sm:$0xff]
    %v287 = vld [vmem:[%s0 + $0x880] sm:$0xff]
    %v288 = vld [vmem:[%s0 + $0x888] sm:$0xff]
    %v289 = vld [vmem:[%s0 + $0x890] sm:$0xff]
    %v290 = vld [vmem:[%s0 + $0x898] sm:$0xff]
    %v291 = vld [vmem:[%s0 + $0x8a0] sm:$0xff]
    %v292 = vld [vmem:[%s0 + $0x8a8] sm:$0xff]
    %v293 = vld [vmem:[%s0 + $0x8b0] sm:$0xff]
    %v294 = vld [vmem:[%s0 + $0x8b8] sm:$0xff]
    %v295 = vld [vmem:[%s0 + $0x8c0] sm:$0xff]
    %v296 = vld [vmem:[%s0 + $0x8c8] sm:$0xff]
    %v297 = vld [vmem:[%s0 + $0x8d0] sm:$0xff]
    %v298 = vld [vmem:[%s0 + $0x8d8] sm:$0xff]
    %v299 = vld [vmem:[%s0 + $0x8e0] sm:$0xff]
    %v300 = vld [vmem:[%s0 + $0x8e8] sm:$0xff]
    %v301 = vld [vmem:[%s0 + $0x8f0] sm:$0xff]
    %v302 = vld [vmem:[%s0 + $0x8f8] sm:$0xff]
    %v303 = vld [vmem:[%s0 + $0x900] sm:$0xff]
    %v304 = vld [vmem:[%s0 + $0x908] sm:$0xff]
    %v305 = vld [vmem:[%s0 + $0x910] sm:$0xff]
    %v306 = vld [vmem:[%s0 + $0x918] sm:$0xff]
    %v307 = vld [vmem:[%s0 + $0x920] sm:$0xff]
    %v308 = vld [vmem:[%s0 + $0x928] sm:$0xff]
    %v309 = vld [vmem:[%s0 + $0x930] sm:$0xff]
    %v310 = vld [vmem:[%s0 + $0x938] sm:$0xff]
    %v311 = vld [vmem:[%s0 + $0x940] sm:$0xff]
    %v312 = vld [vmem:[%s0 + $0x948] sm:$0xff]
    %v313 = vld [vmem:[%s0 + $0x950] sm:$0xff]
    %v314 = vld [vmem:[%s0 + $0x958] sm:$0xff]
    %v315 = vld [vmem:[%s0 + $0x960] sm:$0xff]
    %v316 = vld [vmem:[%s0 + $0x968] sm:$0xff]
    %v317 = vld [vmem:[%s0 + $0x970] sm:$0xff]
    %v318 = vld [vmem:[%s0 + $0x978] sm:$0xff]
    %v319 = vld [vmem:[%s0 + $0x980] sm:$0xff]
    %v320 = vld [vmem:[%s0 + $0x988] sm:$0xff]
    %v321 = vld [vmem:[%s0 + $0x990] sm:$0xff]
    %v322 = vld [vmem:[%s0 + $0x998] sm:$0xff]
    %v323 = vld [vmem:[%s0 + $0x9a0] sm:$0xff]
    %v324 = vld [vmem:[%s0 + $0x9a8] sm:$0xff]
    %v325 = vld [vmem:[%s0 + $0x9b0] sm:$0xff]
    %v326 = vld [vmem:[%s0 + $0x9b8] sm:$0xff]
    %v327 = vld [vmem:[%s0 + $0x9c0] sm:$0xff]
    %v328 = vld [vmem:[%s0 + $0x9c8] sm:$0xff]
    %v329 = vld [vmem:[%s0 + $0x9d0] sm:$0xff]
    %v330 = vld [vmem:[%s0 + $0x9d8] sm:$0xff]
    %v331 = vld [vmem:[%s0 + $0x9e0] sm:$0xff]
    %v332 = vld [vmem:[%s0 + $0x9e8] sm:$0xff]
    %v333 = vld [vmem:[%s0 + $0x9f0] sm:$0xff]
    %v334 = vld [vmem:[%s0 + $0x9f8] sm:$0xff]
    %v335 = vld [vmem:[%s0 + $0xa00] sm:$0xff]
    %v336 = vld [vmem:[%s0 + $0xa08] sm:$0xff]
    %v337 = vld [vmem:[%s0 + $0xa10] sm:$0xff]
    %v338 = vld [vmem:[%s0 + $0xa18] sm:$0xff]
    %v339 = vld [vmem:[%s0 + $0xa20] sm:$0xff]
    %v340 = vld [vmem:[%s0 + $0xa28] sm:$0xff]
    %v341 = vld [vmem:[%s0 + $0xa30] sm:$0xff]
    %v342 = vld [vmem:[%s0 + $0xa38] sm:$0xff]
    %v343 = vld [vmem:[%s0 + $0xa40] sm:$0xff]
    %v344 = vld [vmem:[%s0 + $0xa48] sm:$0xff]
    %v345 = vld [vmem:[%s0 + $0xa50] sm:$0xff]
    %v346 = vld [vmem:[%s0 + $0xa58] sm:$0xff]
    %v347 = vld [vmem:[%s0 + $0xa60] sm:$0xff]
    %v348 = vld [vmem:[%s0 + $0xa68] sm:$0xff]
    %v349 = vld [vmem:[%s0 + $0xa70] sm:$0xff]
    %v350 = vld [vmem:[%s0 + $0xa78] sm:$0xff]
    %v351 = vld [vmem:[%s0 + $0xa80] sm:$0xff]
    %v352 = vld [vmem:[%s0 + $0xa88] sm:$0xff]
    %v353 = vld [vmem:[%s0 + $0xa90] sm:$0xff]
    %v354 = vld [vmem:[%s0 + $0xa98] sm:$0xff]
    %v355 = vld [vmem:[%s0 + $0xaa0] sm:$0xff]
    %v356 = vld [vmem:[%s0 + $0xaa8] sm:$0xff]
    %v357 = vld [vmem:[%s0 + $0xab0] sm:$0xff]
    %v358 = vld [vmem:[%s0 + $0xab8] sm:$0xff]
    %v359 = vld [vmem:[%s0 + $0xac0] sm:$0xff]
    %v360 = vld [vmem:[%s0 + $0xac8] sm:$0xff]
    %v361 = vld [vmem:[%s0 + $0xad0] sm:$0xff]
    %v362 = vld [vmem:[%s0 + $0xad8] sm:$0xff]
    %v363 = vld [vmem:[%s0 + $0xae0] sm:$0xff]
    %v364 = vld [vmem:[%s0 + $0xae8] sm:$0xff]
    %v365 = vld [vmem:[%s0 + $0xaf0] sm:$0xff]
    %v366 = vld [vmem:[%s0 + $0xaf8] sm:$0xff]
    %v367 = vld [vmem:[%s0 + $0xb00] sm:$0xff]
    %v368 = vld [vmem:[%s0 + $0xb08] sm:$0xff]
    %v369 = vld [vmem:[%s0 + $0xb10] sm:$0xff]
    %v370 = vld [vmem:[%s0 + $0xb18] sm:$0xff]
    %v371 = vld [vmem:[%s0 + $0xb20] sm:$0xff]
    %v372 = vld [vmem:[%s0 + $0xb28] sm:$0xff]
    %v373 = vld [vmem:[%s0 + $0xb30] sm:$0xff]
    %v374 = vld [vmem:[%s0 + $0xb38] sm:$0xff]
    %v375 = vld [vmem:[%s0 + $0xb40] sm:$0xff]
    %v376 = vld [vmem:[%s0 + $0xb48] sm:$0xff]
    %v377 = vld [vmem:[%s0 + $0xb50] sm:$0xff]
    %v378 = vld [vmem:[%s0 + $0xb58] sm:$0xff]
    %v379 = vld [vmem:[%s0 + $0xb60] sm:$0xff]
    %v380 = vld [vmem:[%s0 + $0xb68] sm:$0xff]
    %v381 = vld [vmem:[%s0 + $0xb70] sm:$0xff]
    %v382 = vld [vmem:[%s0 + $0xb78] sm:$0xff]
    %v383 = vld [vmem:[%s0 + $0xb80] sm:$0xff]
    %v384 = vld [vmem:[%s0 + $0xb88] sm:$0xff]
    %v385 = vld [vmem:[%s0 + $0xb90] sm:$0xff]
    %v386 = vld [vmem:[%s0 + $0xb98] sm:$0xff]
    %v387 = vld [vmem:[%s0 + $0xba0] sm:$0xff]
    %v388 = vld [vmem:[%s0 + $0xba8] sm:$0xff]
    %v389 = vld [vmem:[%s0 + $0xbb0] sm:$0xff]
    %v390 = vld [vmem:[%s0 + $0xbb8] sm:$0xff]
    %v391 = vld [vmem:[%s0 + $0xbc0] sm:$0xff]
    %v392 = vld [vmem:[%s0 + $0xbc8] sm:$0xff]
    %v393 = vld [vmem:[%s0 + $0xbd0] sm:$0xff]
    %v394 = vld [vmem:[%s0 + $0xbd8] sm:$0xff]
    %v395 = vld [vmem:[%s0 + $0xbe0] sm:$0xff]
    %v396 = vld [vmem:[%s0 + $0xbe8] sm:$0xff]
    %v397 = vld [vmem:[%s0 + $0xbf0] sm:$0xff]
    %v398 = vld [vmem:[%s0 + $0xbf8] sm:$0xff]
    %v399 = vld [vmem:[%s0 + $0xc00] sm:$0xff]
    %v400 = vld [vmem:[%s0 + $0xc08] sm:$0xff]
    %v401 = vld [vmem:[%s0 + $0xc10] sm:$0xff]
    %v402 = vld [vmem:[%s0 + $0xc18] sm:$0xff]
    %v403 = vld [vmem:[%s0 + $0xc20] sm:$0xff]
    %v404 = vld [vmem:[%s0 + $0xc28] sm:$0xff]
    %v405 = vld [vmem:[%s0 + $0xc30] sm:$0xff]
    %v406 = vld [vmem:[%s0 + $0xc38] sm:$0xff]
    %v407 = vld [vmem:[%s0 + $0xc40] sm:$0xff]
    %v408 = vld [vmem:[%s0 + $0xc48] sm:$0xff]
    %v409 = vld [vmem:[%s0 + $0xc50] sm:$0xff]
    %v410 = vld [vmem:[%s0 + $0xc58] sm:$0xff]
    %v411 = vld [vmem:[%s0 + $0xc60] sm:$0xff]
    %v412 = vld [vmem:[%s0 + $0xc68] sm:$0xff]
    %v413 = vld [vmem:[%s0 + $0xc70] sm:$0xff]
    %v414 = vld [vmem:[%s0 + $0xc78] sm:$0xff]
    %v415 = vld [vmem:[%s0 + $0xc80] sm:$0xff]
    %v416 = vld [vmem:[%s0 + $0xc88] sm:$0xff]
    %v417 = vld [vmem:[%s0 + $0xc90] sm:$0xff]
    %v418 = vld [vmem:[%s0 + $0xc98] sm:$0xff]
    %v419 = vld [vmem:[%s0 + $0xca0] sm:$0xff]
    %v420 = vld [vmem:[%s0 + $0xca8] sm:$0xff]
    %v421 = vld [vmem:[%s0 + $0xcb0] sm:$0xff]
    %v422 = vld [vmem:[%s0 + $0xcb8] sm:$0xff]
    %v423 = vld [vmem:[%s0 + $0xcc0] sm:$0xff]
    %v424 = vld [vmem:[%s0 + $0xcc8] sm:$0xff]
    %v425 = vld [vmem:[%s0 + $0xcd0] sm:$0xff]
    %v426 = vld [vmem:[%s0 + $0xcd8] sm:$0xff]
    %v427 = vld [vmem:[%s0 + $0xce0] sm:$0xff]
    %v428 = vld [vmem:[%s0 + $0xce8] sm:$0xff]
    %v429 = vld [vmem:[%s0 + $0xcf0] sm:$0xff]
    %v430 = vld [vmem:[%s0 + $0xcf8] sm:$0xff]
    %v431 = vld [vmem:[%s0 + $0xd00] sm:$0xff]
    %v432 = vld [vmem:[%s0 + $0xd08] sm:$0xff]
    %v433 = vld [vmem:[%s0 + $0xd10] sm:$0xff]
    %v434 = vld [vmem:[%s0 + $0xd18] sm:$0xff]
    %v435 = vld [vmem:[%s0 + $0xd20] sm:$0xff]
    %v436 = vld [vmem:[%s0 + $0xd28] sm:$0xff]
    %v437 = vld [vmem:[%s0 + $0xd30] sm:$0xff]
    %v438 = vld [vmem:[%s0 + $0xd38] sm:$0xff]
    %v439 = vld [vmem:[%s0 + $0xd40] sm:$0xff]
    %v440 = vld [vmem:[%s0 + $0xd48] sm:$0xff]
    %v441 = vld [vmem:[%s0 + $0xd50] sm:$0xff]
    %v442 = vld [vmem:[%s0 + $0xd58] sm:$0xff]
    %v443 = vld [vmem:[%s0 + $0xd60] sm:$0xff]
    %v444 = vld [vmem:[%s0 + $0xd68] sm:$0xff]
    %v445 = vld [vmem:[%s0 + $0xd70] sm:$0xff]
    %v446 = vld [vmem:[%s0 + $0xd78] sm:$0xff]
    %v447 = vld [vmem:[%s0 + $0xd80] sm:$0xff]
    %v448 = vld [vmem:[%s0 + $0xd88] sm:$0xff]
    %v449 = vld [vmem:[%s0 + $0xd90] sm:$0xff]
    %v450 = vld [vmem:[%s0 + $0xd98] sm:$0xff]
    %v451 = vld [vmem:[%s0 + $0xda0] sm:$0xff]
    %v452 = vld [vmem:[%s0 + $0xda8] sm:$0xff]
    %v453 = vld [vmem:[%s0 + $0xdb0] sm:$0xff]
    %v454 = vld [vmem:[%s0 + $0xdb8] sm:$0xff]
    %v455 = vld [vmem:[%s0 + $0xdc0] sm:$0xff]
    %v456 = vld [vmem:[%s0 + $0xdc8] sm:$0xff]
    %v457 = vld [vmem:[%s0 + $0xdd0] sm:$0xff]
    %v458 = vld [vmem:[%s0 + $0xdd8] sm:$0xff]
    %v459 = vld [vmem:[%s0 + $0xde0] sm:$0xff]
    %v460 = vld [vmem:[%s0 + $0xde8] sm:$0xff]
    %v461 = vld [vmem:[%s0 + $0xdf0] sm:$0xff]
    %v462 = vld [vmem:[%s0 + $0xdf8] sm:$0xff]
    %v463 = vld [vmem:[%s0 + $0xe00] sm:$0xff]
    %v464 = vld [vmem:[%s0 + $0xe08] sm:$0xff]
    %v465 = vld [vmem:[%s0 + $0xe10] sm:$0xff]
    %v466 = vld [vmem:[%s0 + $0xe18] sm:$0xff]
    %v467 = vld [vmem:[%s0 + $0xe20] sm:$0xff]
    %v468 = vld [vmem:[%s0 + $0xe28] sm:$0xff]
    %v469 = vld [vmem:[%s0 + $0xe30] sm:$0xff]
    %v470 = vld [vmem:[%s0 + $0xe38] sm:$0xff]
    %v471 = vld [vmem:[%s0 + $0xe40] sm:$0xff]
    %v472 = vld [vmem:[%s0 + $0xe48] sm:$0xff]
    %v473 = vld [vmem:[%s0 + $0xe50] sm:$0xff]
    %v474 = vld [vmem:[%s0 + $0xe58] sm:$0xff]
    %v475 = vld [vmem:[%s0 + $0xe60] sm:$0xff]
    %v476 = vld [vmem:[%s0 + $0xe68] sm:$0xff]
    %v477 = vld [vmem:[%s0 + $0xe70] sm:$0xff]
    %v478 = vld [vmem:[%s0 + $0xe78] sm:$0xff]
    %v479 = vld [vmem:[%s0 + $0xe80] sm:$0xff]
    %v480 = vld [vmem:[%s0 + $0xe88] sm:$0xff]
    %v481 = vld [vmem:[%s0 + $0xe90] sm:$0xff]
    %v482 = vld [vmem:[%s0 + $0xe98] sm:$0xff]
    %v483 = vld [vmem:[%s0 + $0xea0] sm:$0xff]
    %v484 = vld [vmem:[%s0 + $0xea8] sm:$0xff]
    %v485 = vld [vmem:[%s0 + $0xeb0] sm:$0xff]
    %v486 = vld [vmem:[%s0 + $0xeb8] sm:$0xff]
    %v487 = vld [vmem:[%s0 + $0xec0] sm:$0xff]
    %v488 = vld [vmem:[%s0 + $0xec8] sm:$0xff]
    %v489 = vld [vmem:[%s0 + $0xed0] sm:$0xff]
    %v490 = vld [vmem:[%s0 + $0xed8] sm:$0xff]
    %v491 = vld [vmem:[%s0 + $0xee0] sm:$0xff]
    %v492 = vld [vmem:[%s0 + $0xee8] sm:$0xff]
    %v493 = vld [vmem:[%s0 + $0xef0] sm:$0xff]
    %v494 = vld [vmem:[%s0 + $0xef8] sm:$0xff]
    %v495 = vld [vmem:[%s0 + $0xf00] sm:$0xff]
    %v496 = vld [vmem:[%s0 + $0xf08] sm:$0xff]
    %v497 = vld [vmem:[%s0 + $0xf10] sm:$0xff]
    %v498 = vld [vmem:[%s0 + $0xf18] sm:$0xff]
    %v499 = vld [vmem:[%s0 + $0xf20] sm:$0xff]
    %v500 = vld [vmem:[%s0 + $0xf28] sm:$0xff]
    %v501 = vld [vmem:[%s0 + $0xf30] sm:$0xff]
    %v502 = vld [vmem:[%s0 + $0xf38] sm:$0xff]
    %v503 = vld [vmem:[%s0 + $0xf40] sm:$0xff]
    %v504 = vld [vmem:[%s0 + $0xf48] sm:$0xff]
    %v505 = vld [vmem:[%s0 + $0xf50] sm:$0xff]
    %v506 = vld [vmem:[%s0 + $0xf58] sm:$0xff]
    %v507 = vld [vmem:[%s0 + $0xf60] sm:$0xff]
    %v508 = vld [vmem:[%s0 + $0xf68] sm:$0xff]
    %v509 = vld [vmem:[%s0 + $0xf70] sm:$0xff]
    %v510 = vld [vmem:[%s0 + $0xf78] sm:$0xff]
    %v511 = vld [vmem:[%s0 + $0xf80] sm:$0xff]
    %v512 = vld [vmem:[%s0 + $0xf88] sm:$0xff]
    %v513 = vld [vmem:[%s0 + $0xf90] sm:$0xff]
    %v514 = vld [vmem:[%s0 + $0xf98] sm:$0xff]
    %v515 = vld [vmem:[%s0 + $0xfa0] sm:$0xff]
    %v516 = vld [vmem:[%s0 + $0xfa8] sm:$0xff]
    %v517 = vld [vmem:[%s0 + $0xfb0] sm:$0xff]
    %v518 = vld [vmem:[%s0 + $0xfb8] sm:$0xff]
    %v519 = vld [vmem:[%s0 + $0xfc0] sm:$0xff]
    %v520 = vld [vmem:[%s0 + $0xfc8] sm:$0xff]
    %v521 = vld [vmem:[%s0 + $0xfd0] sm:$0xff]
    %v522 = vld [vmem:[%s0 + $0xfd8] sm:$0xff]
    %v523 = vld [vmem:[%s0 + $0xfe0] sm:$0xff]
    %v524 = vld [vmem:[%s0 + $0xfe8] sm:$0xff]
    %v525 = vld [vmem:[%s0 + $0xff0] sm:$0xff]
    %v526 = vld [vmem:[%s0 + $0xff8] sm:$0xff]
    %vm527 = vcmask 31744
    %v528 = vsel %vm527, %v15, 0.0
    %v529 = vsel %vm527, %v16, 0.0
    %v530 = vadd.f32 %v528, %v529
    %v531 = vsel %vm527, %v17, 0.0
    %v532 = vadd.f32 %v530, %v531
    %v533 = vsel %vm527, %v18, 0.0
    %v534 = vadd.f32 %v532, %v533
    %v535 = vsel %vm527, %v19, 0.0
    %v536 = vadd.f32 %v534, %v535
    %v537 = vsel %vm527, %v20, 0.0
    %v538 = vadd.f32 %v536, %v537
    %v539 = vsel %vm527, %v21, 0.0
    %v540 = vadd.f32 %v538, %v539
    %v541 = vsel %vm527, %v22, 0.0
    %v542 = vadd.f32 %v540, %v541
    %v543 = vsel %vm527, %v23, 0.0
    %v544 = vadd.f32 %v542, %v543
    %v545 = vsel %vm527, %v24, 0.0
    %v546 = vadd.f32 %v544, %v545
    %v547 = vsel %vm527, %v25, 0.0
    %v548 = vadd.f32 %v546, %v547
    %v549 = vsel %vm527, %v26, 0.0
    %v550 = vadd.f32 %v548, %v549
    %v551 = vsel %vm527, %v27, 0.0
    %v552 = vadd.f32 %v550, %v551
    %v553 = vsel %vm527, %v28, 0.0
    %v554 = vadd.f32 %v552, %v553
    %v555 = vsel %vm527, %v29, 0.0
    %v556 = vadd.f32 %v554, %v555
    %v557 = vsel %vm527, %v30, 0.0
    %v558 = vadd.f32 %v556, %v557
    %v559 = vsel %vm527, %v31, 0.0
    %v560 = vadd.f32 %v558, %v559
    %v561 = vsel %vm527, %v32, 0.0
    %v562 = vadd.f32 %v560, %v561
    %v563 = vsel %vm527, %v33, 0.0
    %v564 = vadd.f32 %v562, %v563
    %v565 = vsel %vm527, %v34, 0.0
    %v566 = vadd.f32 %v564, %v565
    %v567 = vsel %vm527, %v35, 0.0
    %v568 = vadd.f32 %v566, %v567
    %v569 = vsel %vm527, %v36, 0.0
    %v570 = vadd.f32 %v568, %v569
    %v571 = vsel %vm527, %v37, 0.0
    %v572 = vadd.f32 %v570, %v571
    %v573 = vsel %vm527, %v38, 0.0
    %v574 = vadd.f32 %v572, %v573
    %v575 = vsel %vm527, %v39, 0.0
    %v576 = vadd.f32 %v574, %v575
    %v577 = vsel %vm527, %v40, 0.0
    %v578 = vadd.f32 %v576, %v577
    %v579 = vsel %vm527, %v41, 0.0
    %v580 = vadd.f32 %v578, %v579
    %v581 = vsel %vm527, %v42, 0.0
    %v582 = vadd.f32 %v580, %v581
    %v583 = vsel %vm527, %v43, 0.0
    %v584 = vadd.f32 %v582, %v583
    %v585 = vsel %vm527, %v44, 0.0
    %v586 = vadd.f32 %v584, %v585
    %v587 = vsel %vm527, %v45, 0.0
    %v588 = vadd.f32 %v586, %v587
    %v589 = vsel %vm527, %v46, 0.0
    %v590 = vadd.f32 %v588, %v589
    %v591 = vrot.slane %v590, 4
    %v592 = vadd.f32 %v590, %v591
    %v593 = vrot.slane %v592, 2
    %v594 = vadd.f32 %v592, %v593
    %v595 = vrot.slane %v594, 1
    %v596 = vadd.f32 %v594, %v595
    %v597 = vsel %vm527, %v47, 0.0
    %v598 = vsel %vm527, %v48, 0.0
    %v599 = vadd.f32 %v597, %v598
    %v600 = vsel %vm527, %v49, 0.0
    %v601 = vadd.f32 %v599, %v600
    %v602 = vsel %vm527, %v50, 0.0
    %v603 = vadd.f32 %v601, %v602
    %v604 = vsel %vm527, %v51, 0.0
    %v605 = vadd.f32 %v603, %v604
    %v606 = vsel %vm527, %v52, 0.0
    %v607 = vadd.f32 %v605, %v606
    %v608 = vsel %vm527, %v53, 0.0
    %v609 = vadd.f32 %v607, %v608
    %v610 = vsel %vm527, %v54, 0.0
    %v611 = vadd.f32 %v609, %v610
    %v612 = vsel %vm527, %v55, 0.0
    %v613 = vadd.f32 %v611, %v612
    %v614 = vsel %vm527, %v56, 0.0
    %v615 = vadd.f32 %v613, %v614
    %v616 = vsel %vm527, %v57, 0.0
    %v617 = vadd.f32 %v615, %v616
    %v618 = vsel %vm527, %v58, 0.0
    %v619 = vadd.f32 %v617, %v618
    %v620 = vsel %vm527, %v59, 0.0
    %v621 = vadd.f32 %v619, %v620
    %v622 = vsel %vm527, %v60, 0.0
    %v623 = vadd.f32 %v621, %v622
    %v624 = vsel %vm527, %v61, 0.0
    %v625 = vadd.f32 %v623, %v624
    %v626 = vsel %vm527, %v62, 0.0
    %v627 = vadd.f32 %v625, %v626
    %v628 = vsel %vm527, %v63, 0.0
    %v629 = vadd.f32 %v627, %v628
    %v630 = vsel %vm527, %v64, 0.0
    %v631 = vadd.f32 %v629, %v630
    %v632 = vsel %vm527, %v65, 0.0
    %v633 = vadd.f32 %v631, %v632
    %v634 = vsel %vm527, %v66, 0.0
    %v635 = vadd.f32 %v633, %v634
    %v636 = vsel %vm527, %v67, 0.0
    %v637 = vadd.f32 %v635, %v636
    %v638 = vsel %vm527, %v68, 0.0
    %v639 = vadd.f32 %v637, %v638
    %v640 = vsel %vm527, %v69, 0.0
    %v641 = vadd.f32 %v639, %v640
    %v642 = vsel %vm527, %v70, 0.0
    %v643 = vadd.f32 %v641, %v642
    %v644 = vsel %vm527, %v71, 0.0
    %v645 = vadd.f32 %v643, %v644
    %v646 = vsel %vm527, %v72, 0.0
    %v647 = vadd.f32 %v645, %v646
    %v648 = vsel %vm527, %v73, 0.0
    %v649 = vadd.f32 %v647, %v648
    %v650 = vsel %vm527, %v74, 0.0
    %v651 = vadd.f32 %v649, %v650
    %v652 = vsel %vm527, %v75, 0.0
    %v653 = vadd.f32 %v651, %v652
    %v654 = vsel %vm527, %v76, 0.0
    %v655 = vadd.f32 %v653, %v654
    %v656 = vsel %vm527, %v77, 0.0
    %v657 = vadd.f32 %v655, %v656
    %v658 = vsel %vm527, %v78, 0.0
    %v659 = vadd.f32 %v657, %v658
    %v660 = vrot.slane %v659, 4
    %v661 = vadd.f32 %v659, %v660
    %v662 = vrot.slane %v661, 2
    %v663 = vadd.f32 %v661, %v662
    %v664 = vrot.slane %v663, 1
    %v665 = vadd.f32 %v663, %v664
    %v666 = vsel %vm527, %v79, 0.0
    %v667 = vsel %vm527, %v80, 0.0
    %v668 = vadd.f32 %v666, %v667
    %v669 = vsel %vm527, %v81, 0.0
    %v670 = vadd.f32 %v668, %v669
    %v671 = vsel %vm527, %v82, 0.0
    %v672 = vadd.f32 %v670, %v671
    %v673 = vsel %vm527, %v83, 0.0
    %v674 = vadd.f32 %v672, %v673
    %v675 = vsel %vm527, %v84, 0.0
    %v676 = vadd.f32 %v674, %v675
    %v677 = vsel %vm527, %v85, 0.0
    %v678 = vadd.f32 %v676, %v677
    %v679 = vsel %vm527, %v86, 0.0
    %v680 = vadd.f32 %v678, %v679
    %v681 = vsel %vm527, %v87, 0.0
    %v682 = vadd.f32 %v680, %v681
    %v683 = vsel %vm527, %v88, 0.0
    %v684 = vadd.f32 %v682, %v683
    %v685 = vsel %vm527, %v89, 0.0
    %v686 = vadd.f32 %v684, %v685
    %v687 = vsel %vm527, %v90, 0.0
    %v688 = vadd.f32 %v686, %v687
    %v689 = vsel %vm527, %v91, 0.0
    %v690 = vadd.f32 %v688, %v689
    %v691 = vsel %vm527, %v92, 0.0
    %v692 = vadd.f32 %v690, %v691
    %v693 = vsel %vm527, %v93, 0.0
    %v694 = vadd.f32 %v692, %v693
    %v695 = vsel %vm527, %v94, 0.0
    %v696 = vadd.f32 %v694, %v695
    %v697 = vsel %vm527, %v95, 0.0
    %v698 = vadd.f32 %v696, %v697
    %v699 = vsel %vm527, %v96, 0.0
    %v700 = vadd.f32 %v698, %v699
    %v701 = vsel %vm527, %v97, 0.0
    %v702 = vadd.f32 %v700, %v701
    %v703 = vsel %vm527, %v98, 0.0
    %v704 = vadd.f32 %v702, %v703
    %v705 = vsel %vm527, %v99, 0.0
    %v706 = vadd.f32 %v704, %v705
    %v707 = vsel %vm527, %v100, 0.0
    %v708 = vadd.f32 %v706, %v707
    %v709 = vsel %vm527, %v101, 0.0
    %v710 = vadd.f32 %v708, %v709
    %v711 = vsel %vm527, %v102, 0.0
    %v712 = vadd.f32 %v710, %v711
    %v713 = vsel %vm527, %v103, 0.0
    %v714 = vadd.f32 %v712, %v713
    %v715 = vsel %vm527, %v104, 0.0
    %v716 = vadd.f32 %v714, %v715
    %v717 = vsel %vm527, %v105, 0.0
    %v718 = vadd.f32 %v716, %v717
    %v719 = vsel %vm527, %v106, 0.0
    %v720 = vadd.f32 %v718, %v719
    %v721 = vsel %vm527, %v107, 0.0
    %v722 = vadd.f32 %v720, %v721
    %v723 = vsel %vm527, %v108, 0.0
    %v724 = vadd.f32 %v722, %v723
    %v725 = vsel %vm527, %v109, 0.0
    %v726 = vadd.f32 %v724, %v725
    %v727 = vsel %vm527, %v110, 0.0
    %v728 = vadd.f32 %v726, %v727
    %v729 = vrot.slane %v728, 4
    %v730 = vadd.f32 %v728, %v729
    %v731 = vrot.slane %v730, 2
    %v732 = vadd.f32 %v730, %v731
    %v733 = vrot.slane %v732, 1
    %v734 = vadd.f32 %v732, %v733
    %v735 = vsel %vm527, %v111, 0.0
    %v736 = vsel %vm527, %v112, 0.0
    %v737 = vadd.f32 %v735, %v736
    %v738 = vsel %vm527, %v113, 0.0
    %v739 = vadd.f32 %v737, %v738
    %v740 = vsel %vm527, %v114, 0.0
    %v741 = vadd.f32 %v739, %v740
    %v742 = vsel %vm527, %v115, 0.0
    %v743 = vadd.f32 %v741, %v742
    %v744 = vsel %vm527, %v116, 0.0
    %v745 = vadd.f32 %v743, %v744
    %v746 = vsel %vm527, %v117, 0.0
    %v747 = vadd.f32 %v745, %v746
    %v748 = vsel %vm527, %v118, 0.0
    %v749 = vadd.f32 %v747, %v748
    %v750 = vsel %vm527, %v119, 0.0
    %v751 = vadd.f32 %v749, %v750
    %v752 = vsel %vm527, %v120, 0.0
    %v753 = vadd.f32 %v751, %v752
    %v754 = vsel %vm527, %v121, 0.0
    %v755 = vadd.f32 %v753, %v754
    %v756 = vsel %vm527, %v122, 0.0
    %v757 = vadd.f32 %v755, %v756
    %v758 = vsel %vm527, %v123, 0.0
    %v759 = vadd.f32 %v757, %v758
    %v760 = vsel %vm527, %v124, 0.0
    %v761 = vadd.f32 %v759, %v760
    %v762 = vsel %vm527, %v125, 0.0
    %v763 = vadd.f32 %v761, %v762
    %v764 = vsel %vm527, %v126, 0.0
    %v765 = vadd.f32 %v763, %v764
    %v766 = vsel %vm527, %v127, 0.0
    %v767 = vadd.f32 %v765, %v766
    %v768 = vsel %vm527, %v128, 0.0
    %v769 = vadd.f32 %v767, %v768
    %v770 = vsel %vm527, %v129, 0.0
    %v771 = vadd.f32 %v769, %v770
    %v772 = vsel %vm527, %v130, 0.0
    %v773 = vadd.f32 %v771, %v772
    %v774 = vsel %vm527, %v131, 0.0
    %v775 = vadd.f32 %v773, %v774
    %v776 = vsel %vm527, %v132, 0.0
    %v777 = vadd.f32 %v775, %v776
    %v778 = vsel %vm527, %v133, 0.0
    %v779 = vadd.f32 %v777, %v778
    %v780 = vsel %vm527, %v134, 0.0
    %v781 = vadd.f32 %v779, %v780
    %v782 = vsel %vm527, %v135, 0.0
    %v783 = vadd.f32 %v781, %v782
    %v784 = vsel %vm527, %v136, 0.0
    %v785 = vadd.f32 %v783, %v784
    %v786 = vsel %vm527, %v137, 0.0
    %v787 = vadd.f32 %v785, %v786
    %v788 = vsel %vm527, %v138, 0.0
    %v789 = vadd.f32 %v787, %v788
    %v790 = vsel %vm527, %v139, 0.0
    %v791 = vadd.f32 %v789, %v790
    %v792 = vsel %vm527, %v140, 0.0
    %v793 = vadd.f32 %v791, %v792
    %v794 = vsel %vm527, %v141, 0.0
    %v795 = vadd.f32 %v793, %v794
    %v796 = vsel %vm527, %v142, 0.0
    %v797 = vadd.f32 %v795, %v796
    %v798 = vrot.slane %v797, 4
    %v799 = vadd.f32 %v797, %v798
    %v800 = vrot.slane %v799, 2
    %v801 = vadd.f32 %v799, %v800
    %v802 = vrot.slane %v801, 1
    %v803 = vadd.f32 %v801, %v802
    %v804 = vsel %vm527, %v143, 0.0
    %v805 = vsel %vm527, %v144, 0.0
    %v806 = vadd.f32 %v804, %v805
    %v807 = vsel %vm527, %v145, 0.0
    %v808 = vadd.f32 %v806, %v807
    %v809 = vsel %vm527, %v146, 0.0
    %v810 = vadd.f32 %v808, %v809
    %v811 = vsel %vm527, %v147, 0.0
    %v812 = vadd.f32 %v810, %v811
    %v813 = vsel %vm527, %v148, 0.0
    %v814 = vadd.f32 %v812, %v813
    %v815 = vsel %vm527, %v149, 0.0
    %v816 = vadd.f32 %v814, %v815
    %v817 = vsel %vm527, %v150, 0.0
    %v818 = vadd.f32 %v816, %v817
    %v819 = vsel %vm527, %v151, 0.0
    %v820 = vadd.f32 %v818, %v819
    %v821 = vsel %vm527, %v152, 0.0
    %v822 = vadd.f32 %v820, %v821
    %v823 = vsel %vm527, %v153, 0.0
    %v824 = vadd.f32 %v822, %v823
    %v825 = vsel %vm527, %v154, 0.0
    %v826 = vadd.f32 %v824, %v825
    %v827 = vsel %vm527, %v155, 0.0
    %v828 = vadd.f32 %v826, %v827
    %v829 = vsel %vm527, %v156, 0.0
    %v830 = vadd.f32 %v828, %v829
    %v831 = vsel %vm527, %v157, 0.0
    %v832 = vadd.f32 %v830, %v831
    %v833 = vsel %vm527, %v158, 0.0
    %v834 = vadd.f32 %v832, %v833
    %v835 = vsel %vm527, %v159, 0.0
    %v836 = vadd.f32 %v834, %v835
    %v837 = vsel %vm527, %v160, 0.0
    %v838 = vadd.f32 %v836, %v837
    %v839 = vsel %vm527, %v161, 0.0
    %v840 = vadd.f32 %v838, %v839
    %v841 = vsel %vm527, %v162, 0.0
    %v842 = vadd.f32 %v840, %v841
    %v843 = vsel %vm527, %v163, 0.0
    %v844 = vadd.f32 %v842, %v843
    %v845 = vsel %vm527, %v164, 0.0
    %v846 = vadd.f32 %v844, %v845
    %v847 = vsel %vm527, %v165, 0.0
    %v848 = vadd.f32 %v846, %v847
    %v849 = vsel %vm527, %v166, 0.0
    %v850 = vadd.f32 %v848, %v849
    %v851 = vsel %vm527, %v167, 0.0
    %v852 = vadd.f32 %v850, %v851
    %v853 = vsel %vm527, %v168, 0.0
    %v854 = vadd.f32 %v852, %v853
    %v855 = vsel %vm527, %v169, 0.0
    %v856 = vadd.f32 %v854, %v855
    %v857 = vsel %vm527, %v170, 0.0
    %v858 = vadd.f32 %v856, %v857
    %v859 = vsel %vm527, %v171, 0.0
    %v860 = vadd.f32 %v858, %v859
    %v861 = vsel %vm527, %v172, 0.0
    %v862 = vadd.f32 %v860, %v861
    %v863 = vsel %vm527, %v173, 0.0
    %v864 = vadd.f32 %v862, %v863
    %v865 = vsel %vm527, %v174, 0.0
    %v866 = vadd.f32 %v864, %v865
    %v867 = vrot.slane %v866, 4
    %v868 = vadd.f32 %v866, %v867
    %v869 = vrot.slane %v868, 2
    %v870 = vadd.f32 %v868, %v869
    %v871 = vrot.slane %v870, 1
    %v872 = vadd.f32 %v870, %v871
    %v873 = vsel %vm527, %v175, 0.0
    %v874 = vsel %vm527, %v176, 0.0
    %v875 = vadd.f32 %v873, %v874
    %v876 = vsel %vm527, %v177, 0.0
    %v877 = vadd.f32 %v875, %v876
    %v878 = vsel %vm527, %v178, 0.0
    %v879 = vadd.f32 %v877, %v878
    %v880 = vsel %vm527, %v179, 0.0
    %v881 = vadd.f32 %v879, %v880
    %v882 = vsel %vm527, %v180, 0.0
    %v883 = vadd.f32 %v881, %v882
    %v884 = vsel %vm527, %v181, 0.0
    %v885 = vadd.f32 %v883, %v884
    %v886 = vsel %vm527, %v182, 0.0
    %v887 = vadd.f32 %v885, %v886
    %v888 = vsel %vm527, %v183, 0.0
    %v889 = vadd.f32 %v887, %v888
    %v890 = vsel %vm527, %v184, 0.0
    %v891 = vadd.f32 %v889, %v890
    %v892 = vsel %vm527, %v185, 0.0
    %v893 = vadd.f32 %v891, %v892
    %v894 = vsel %vm527, %v186, 0.0
    %v895 = vadd.f32 %v893, %v894
    %v896 = vsel %vm527, %v187, 0.0
    %v897 = vadd.f32 %v895, %v896
    %v898 = vsel %vm527, %v188, 0.0
    %v899 = vadd.f32 %v897, %v898
    %v900 = vsel %vm527, %v189, 0.0
    %v901 = vadd.f32 %v899, %v900
    %v902 = vsel %vm527, %v190, 0.0
    %v903 = vadd.f32 %v901, %v902
    %v904 = vsel %vm527, %v191, 0.0
    %v905 = vadd.f32 %v903, %v904
    %v906 = vsel %vm527, %v192, 0.0
    %v907 = vadd.f32 %v905, %v906
    %v908 = vsel %vm527, %v193, 0.0
    %v909 = vadd.f32 %v907, %v908
    %v910 = vsel %vm527, %v194, 0.0
    %v911 = vadd.f32 %v909, %v910
    %v912 = vsel %vm527, %v195, 0.0
    %v913 = vadd.f32 %v911, %v912
    %v914 = vsel %vm527, %v196, 0.0
    %v915 = vadd.f32 %v913, %v914
    %v916 = vsel %vm527, %v197, 0.0
    %v917 = vadd.f32 %v915, %v916
    %v918 = vsel %vm527, %v198, 0.0
    %v919 = vadd.f32 %v917, %v918
    %v920 = vsel %vm527, %v199, 0.0
    %v921 = vadd.f32 %v919, %v920
    %v922 = vsel %vm527, %v200, 0.0
    %v923 = vadd.f32 %v921, %v922
    %v924 = vsel %vm527, %v201, 0.0
    %v925 = vadd.f32 %v923, %v924
    %v926 = vsel %vm527, %v202, 0.0
    %v927 = vadd.f32 %v925, %v926
    %v928 = vsel %vm527, %v203, 0.0
    %v929 = vadd.f32 %v927, %v928
    %v930 = vsel %vm527, %v204, 0.0
    %v931 = vadd.f32 %v929, %v930
    %v932 = vsel %vm527, %v205, 0.0
    %v933 = vadd.f32 %v931, %v932
    %v934 = vsel %vm527, %v206, 0.0
    %v935 = vadd.f32 %v933, %v934
    %v936 = vrot.slane %v935, 4
    %v937 = vadd.f32 %v935, %v936
    %v938 = vrot.slane %v937, 2
    %v939 = vadd.f32 %v937, %v938
    %v940 = vrot.slane %v939, 1
    %v941 = vadd.f32 %v939, %v940
    %v942 = vsel %vm527, %v207, 0.0
    %v943 = vsel %vm527, %v208, 0.0
    %v944 = vadd.f32 %v942, %v943
    %v945 = vsel %vm527, %v209, 0.0
    %v946 = vadd.f32 %v944, %v945
    %v947 = vsel %vm527, %v210, 0.0
    %v948 = vadd.f32 %v946, %v947
    %v949 = vsel %vm527, %v211, 0.0
    %v950 = vadd.f32 %v948, %v949
    %v951 = vsel %vm527, %v212, 0.0
    %v952 = vadd.f32 %v950, %v951
    %v953 = vsel %vm527, %v213, 0.0
    %v954 = vadd.f32 %v952, %v953
    %v955 = vsel %vm527, %v214, 0.0
    %v956 = vadd.f32 %v954, %v955
    %v957 = vsel %vm527, %v215, 0.0
    %v958 = vadd.f32 %v956, %v957
    %v959 = vsel %vm527, %v216, 0.0
    %v960 = vadd.f32 %v958, %v959
    %v961 = vsel %vm527, %v217, 0.0
    %v962 = vadd.f32 %v960, %v961
    %v963 = vsel %vm527, %v218, 0.0
    %v964 = vadd.f32 %v962, %v963
    %v965 = vsel %vm527, %v219, 0.0
    %v966 = vadd.f32 %v964, %v965
    %v967 = vsel %vm527, %v220, 0.0
    %v968 = vadd.f32 %v966, %v967
    %v969 = vsel %vm527, %v221, 0.0
    %v970 = vadd.f32 %v968, %v969
    %v971 = vsel %vm527, %v222, 0.0
    %v972 = vadd.f32 %v970, %v971
    %v973 = vsel %vm527, %v223, 0.0
    %v974 = vadd.f32 %v972, %v973
    %v975 = vsel %vm527, %v224, 0.0
    %v976 = vadd.f32 %v974, %v975
    %v977 = vsel %vm527, %v225, 0.0
    %v978 = vadd.f32 %v976, %v977
    %v979 = vsel %vm527, %v226, 0.0
    %v980 = vadd.f32 %v978, %v979
    %v981 = vsel %vm527, %v227, 0.0
    %v982 = vadd.f32 %v980, %v981
    %v983 = vsel %vm527, %v228, 0.0
    %v984 = vadd.f32 %v982, %v983
    %v985 = vsel %vm527, %v229, 0.0
    %v986 = vadd.f32 %v984, %v985
    %v987 = vsel %vm527, %v230, 0.0
    %v988 = vadd.f32 %v986, %v987
    %v989 = vsel %vm527, %v231, 0.0
    %v990 = vadd.f32 %v988, %v989
    %v991 = vsel %vm527, %v232, 0.0
    %v992 = vadd.f32 %v990, %v991
    %v993 = vsel %vm527, %v233, 0.0
    %v994 = vadd.f32 %v992, %v993
    %v995 = vsel %vm527, %v234, 0.0
    %v996 = vadd.f32 %v994, %v995
    %v997 = vsel %vm527, %v235, 0.0
    %v998 = vadd.f32 %v996, %v997
    %v999 = vsel %vm527, %v236, 0.0
    %v1000 = vadd.f32 %v998, %v999
    %v1001 = vsel %vm527, %v237, 0.0
    %v1002 = vadd.f32 %v1000, %v1001
    %v1003 = vsel %vm527, %v238, 0.0
    %v1004 = vadd.f32 %v1002, %v1003
    %v1005 = vrot.slane %v1004, 4
    %v1006 = vadd.f32 %v1004, %v1005
    %v1007 = vrot.slane %v1006, 2
    %v1008 = vadd.f32 %v1006, %v1007
    %v1009 = vrot.slane %v1008, 1
    %v1010 = vadd.f32 %v1008, %v1009
    %v1011 = vsel %vm527, %v239, 0.0
    %v1012 = vsel %vm527, %v240, 0.0
    %v1013 = vadd.f32 %v1011, %v1012
    %v1014 = vsel %vm527, %v241, 0.0
    %v1015 = vadd.f32 %v1013, %v1014
    %v1016 = vsel %vm527, %v242, 0.0
    %v1017 = vadd.f32 %v1015, %v1016
    %v1018 = vsel %vm527, %v243, 0.0
    %v1019 = vadd.f32 %v1017, %v1018
    %v1020 = vsel %vm527, %v244, 0.0
    %v1021 = vadd.f32 %v1019, %v1020
    %v1022 = vsel %vm527, %v245, 0.0
    %v1023 = vadd.f32 %v1021, %v1022
    %v1024 = vsel %vm527, %v246, 0.0
    %v1025 = vadd.f32 %v1023, %v1024
    %v1026 = vsel %vm527, %v247, 0.0
    %v1027 = vadd.f32 %v1025, %v1026
    %v1028 = vsel %vm527, %v248, 0.0
    %v1029 = vadd.f32 %v1027, %v1028
    %v1030 = vsel %vm527, %v249, 0.0
    %v1031 = vadd.f32 %v1029, %v1030
    %v1032 = vsel %vm527, %v250, 0.0
    %v1033 = vadd.f32 %v1031, %v1032
    %v1034 = vsel %vm527, %v251, 0.0
    %v1035 = vadd.f32 %v1033, %v1034
    %v1036 = vsel %vm527, %v252, 0.0
    %v1037 = vadd.f32 %v1035, %v1036
    %v1038 = vsel %vm527, %v253, 0.0
    %v1039 = vadd.f32 %v1037, %v1038
    %v1040 = vsel %vm527, %v254, 0.0
    %v1041 = vadd.f32 %v1039, %v1040
    %v1042 = vsel %vm527, %v255, 0.0
    %v1043 = vadd.f32 %v1041, %v1042
    %v1044 = vsel %vm527, %v256, 0.0
    %v1045 = vadd.f32 %v1043, %v1044
    %v1046 = vsel %vm527, %v257, 0.0
    %v1047 = vadd.f32 %v1045, %v1046
    %v1048 = vsel %vm527, %v258, 0.0
    %v1049 = vadd.f32 %v1047, %v1048
    %v1050 = vsel %vm527, %v259, 0.0
    %v1051 = vadd.f32 %v1049, %v1050
    %v1052 = vsel %vm527, %v260, 0.0
    %v1053 = vadd.f32 %v1051, %v1052
    %v1054 = vsel %vm527, %v261, 0.0
    %v1055 = vadd.f32 %v1053, %v1054
    %v1056 = vsel %vm527, %v262, 0.0
    %v1057 = vadd.f32 %v1055, %v1056
    %v1058 = vsel %vm527, %v263, 0.0
    %v1059 = vadd.f32 %v1057, %v1058
    %v1060 = vsel %vm527, %v264, 0.0
    %v1061 = vadd.f32 %v1059, %v1060
    %v1062 = vsel %vm527, %v265, 0.0
    %v1063 = vadd.f32 %v1061, %v1062
    %v1064 = vsel %vm527, %v266, 0.0
    %v1065 = vadd.f32 %v1063, %v1064
    %v1066 = vsel %vm527, %v267, 0.0
    %v1067 = vadd.f32 %v1065, %v1066
    %v1068 = vsel %vm527, %v268, 0.0
    %v1069 = vadd.f32 %v1067, %v1068
    %v1070 = vsel %vm527, %v269, 0.0
    %v1071 = vadd.f32 %v1069, %v1070
    %v1072 = vsel %vm527, %v270, 0.0
    %v1073 = vadd.f32 %v1071, %v1072
    %v1074 = vrot.slane %v1073, 4
    %v1075 = vadd.f32 %v1073, %v1074
    %v1076 = vrot.slane %v1075, 2
    %v1077 = vadd.f32 %v1075, %v1076
    %v1078 = vrot.slane %v1077, 1
    %v1079 = vadd.f32 %v1077, %v1078
    %v1080 = vsel %vm527, %v271, 0.0
    %v1081 = vsel %vm527, %v272, 0.0
    %v1082 = vadd.f32 %v1080, %v1081
    %v1083 = vsel %vm527, %v273, 0.0
    %v1084 = vadd.f32 %v1082, %v1083
    %v1085 = vsel %vm527, %v274, 0.0
    %v1086 = vadd.f32 %v1084, %v1085
    %v1087 = vsel %vm527, %v275, 0.0
    %v1088 = vadd.f32 %v1086, %v1087
    %v1089 = vsel %vm527, %v276, 0.0
    %v1090 = vadd.f32 %v1088, %v1089
    %v1091 = vsel %vm527, %v277, 0.0
    %v1092 = vadd.f32 %v1090, %v1091
    %v1093 = vsel %vm527, %v278, 0.0
    %v1094 = vadd.f32 %v1092, %v1093
    %v1095 = vsel %vm527, %v279, 0.0
    %v1096 = vadd.f32 %v1094, %v1095
    %v1097 = vsel %vm527, %v280, 0.0
    %v1098 = vadd.f32 %v1096, %v1097
    %v1099 = vsel %vm527, %v281, 0.0
    %v1100 = vadd.f32 %v1098, %v1099
    %v1101 = vsel %vm527, %v282, 0.0
    %v1102 = vadd.f32 %v1100, %v1101
    %v1103 = vsel %vm527, %v283, 0.0
    %v1104 = vadd.f32 %v1102, %v1103
    %v1105 = vsel %vm527, %v284, 0.0
    %v1106 = vadd.f32 %v1104, %v1105
    %v1107 = vsel %vm527, %v285, 0.0
    %v1108 = vadd.f32 %v1106, %v1107
    %v1109 = vsel %vm527, %v286, 0.0
    %v1110 = vadd.f32 %v1108, %v1109
    %v1111 = vsel %vm527, %v287, 0.0
    %v1112 = vadd.f32 %v1110, %v1111
    %v1113 = vsel %vm527, %v288, 0.0
    %v1114 = vadd.f32 %v1112, %v1113
    %v1115 = vsel %vm527, %v289, 0.0
    %v1116 = vadd.f32 %v1114, %v1115
    %v1117 = vsel %vm527, %v290, 0.0
    %v1118 = vadd.f32 %v1116, %v1117
    %v1119 = vsel %vm527, %v291, 0.0
    %v1120 = vadd.f32 %v1118, %v1119
    %v1121 = vsel %vm527, %v292, 0.0
    %v1122 = vadd.f32 %v1120, %v1121
    %v1123 = vsel %vm527, %v293, 0.0
    %v1124 = vadd.f32 %v1122, %v1123
    %v1125 = vsel %vm527, %v294, 0.0
    %v1126 = vadd.f32 %v1124, %v1125
    %v1127 = vsel %vm527, %v295, 0.0
    %v1128 = vadd.f32 %v1126, %v1127
    %v1129 = vsel %vm527, %v296, 0.0
    %v1130 = vadd.f32 %v1128, %v1129
    %v1131 = vsel %vm527, %v297, 0.0
    %v1132 = vadd.f32 %v1130, %v1131
    %v1133 = vsel %vm527, %v298, 0.0
    %v1134 = vadd.f32 %v1132, %v1133
    %v1135 = vsel %vm527, %v299, 0.0
    %v1136 = vadd.f32 %v1134, %v1135
    %v1137 = vsel %vm527, %v300, 0.0
    %v1138 = vadd.f32 %v1136, %v1137
    %v1139 = vsel %vm527, %v301, 0.0
    %v1140 = vadd.f32 %v1138, %v1139
    %v1141 = vsel %vm527, %v302, 0.0
    %v1142 = vadd.f32 %v1140, %v1141
    %v1143 = vrot.slane %v1142, 4
    %v1144 = vadd.f32 %v1142, %v1143
    %v1145 = vrot.slane %v1144, 2
    %v1146 = vadd.f32 %v1144, %v1145
    %v1147 = vrot.slane %v1146, 1
    %v1148 = vadd.f32 %v1146, %v1147
    %v1149 = vsel %vm527, %v303, 0.0
    %v1150 = vsel %vm527, %v304, 0.0
    %v1151 = vadd.f32 %v1149, %v1150
    %v1152 = vsel %vm527, %v305, 0.0
    %v1153 = vadd.f32 %v1151, %v1152
    %v1154 = vsel %vm527, %v306, 0.0
    %v1155 = vadd.f32 %v1153, %v1154
    %v1156 = vsel %vm527, %v307, 0.0
    %v1157 = vadd.f32 %v1155, %v1156
    %v1158 = vsel %vm527, %v308, 0.0
    %v1159 = vadd.f32 %v1157, %v1158
    %v1160 = vsel %vm527, %v309, 0.0
    %v1161 = vadd.f32 %v1159, %v1160
    %v1162 = vsel %vm527, %v310, 0.0
    %v1163 = vadd.f32 %v1161, %v1162
    %v1164 = vsel %vm527, %v311, 0.0
    %v1165 = vadd.f32 %v1163, %v1164
    %v1166 = vsel %vm527, %v312, 0.0
    %v1167 = vadd.f32 %v1165, %v1166
    %v1168 = vsel %vm527, %v313, 0.0
    %v1169 = vadd.f32 %v1167, %v1168
    %v1170 = vsel %vm527, %v314, 0.0
    %v1171 = vadd.f32 %v1169, %v1170
    %v1172 = vsel %vm527, %v315, 0.0
    %v1173 = vadd.f32 %v1171, %v1172
    %v1174 = vsel %vm527, %v316, 0.0
    %v1175 = vadd.f32 %v1173, %v1174
    %v1176 = vsel %vm527, %v317, 0.0
    %v1177 = vadd.f32 %v1175, %v1176
    %v1178 = vsel %vm527, %v318, 0.0
    %v1179 = vadd.f32 %v1177, %v1178
    %v1180 = vsel %vm527, %v319, 0.0
    %v1181 = vadd.f32 %v1179, %v1180
    %v1182 = vsel %vm527, %v320, 0.0
    %v1183 = vadd.f32 %v1181, %v1182
    %v1184 = vsel %vm527, %v321, 0.0
    %v1185 = vadd.f32 %v1183, %v1184
    %v1186 = vsel %vm527, %v322, 0.0
    %v1187 = vadd.f32 %v1185, %v1186
    %v1188 = vsel %vm527, %v323, 0.0
    %v1189 = vadd.f32 %v1187, %v1188
    %v1190 = vsel %vm527, %v324, 0.0
    %v1191 = vadd.f32 %v1189, %v1190
    %v1192 = vsel %vm527, %v325, 0.0
    %v1193 = vadd.f32 %v1191, %v1192
    %v1194 = vsel %vm527, %v326, 0.0
    %v1195 = vadd.f32 %v1193, %v1194
    %v1196 = vsel %vm527, %v327, 0.0
    %v1197 = vadd.f32 %v1195, %v1196
    %v1198 = vsel %vm527, %v328, 0.0
    %v1199 = vadd.f32 %v1197, %v1198
    %v1200 = vsel %vm527, %v329, 0.0
    %v1201 = vadd.f32 %v1199, %v1200
    %v1202 = vsel %vm527, %v330, 0.0
    %v1203 = vadd.f32 %v1201, %v1202
    %v1204 = vsel %vm527, %v331, 0.0
    %v1205 = vadd.f32 %v1203, %v1204
    %v1206 = vsel %vm527, %v332, 0.0
    %v1207 = vadd.f32 %v1205, %v1206
    %v1208 = vsel %vm527, %v333, 0.0
    %v1209 = vadd.f32 %v1207, %v1208
    %v1210 = vsel %vm527, %v334, 0.0
    %v1211 = vadd.f32 %v1209, %v1210
    %v1212 = vrot.slane %v1211, 4
    %v1213 = vadd.f32 %v1211, %v1212
    %v1214 = vrot.slane %v1213, 2
    %v1215 = vadd.f32 %v1213, %v1214
    %v1216 = vrot.slane %v1215, 1
    %v1217 = vadd.f32 %v1215, %v1216
    %v1218 = vsel %vm527, %v335, 0.0
    %v1219 = vsel %vm527, %v336, 0.0
    %v1220 = vadd.f32 %v1218, %v1219
    %v1221 = vsel %vm527, %v337, 0.0
    %v1222 = vadd.f32 %v1220, %v1221
    %v1223 = vsel %vm527, %v338, 0.0
    %v1224 = vadd.f32 %v1222, %v1223
    %v1225 = vsel %vm527, %v339, 0.0
    %v1226 = vadd.f32 %v1224, %v1225
    %v1227 = vsel %vm527, %v340, 0.0
    %v1228 = vadd.f32 %v1226, %v1227
    %v1229 = vsel %vm527, %v341, 0.0
    %v1230 = vadd.f32 %v1228, %v1229
    %v1231 = vsel %vm527, %v342, 0.0
    %v1232 = vadd.f32 %v1230, %v1231
    %v1233 = vsel %vm527, %v343, 0.0
    %v1234 = vadd.f32 %v1232, %v1233
    %v1235 = vsel %vm527, %v344, 0.0
    %v1236 = vadd.f32 %v1234, %v1235
    %v1237 = vsel %vm527, %v345, 0.0
    %v1238 = vadd.f32 %v1236, %v1237
    %v1239 = vsel %vm527, %v346, 0.0
    %v1240 = vadd.f32 %v1238, %v1239
    %v1241 = vsel %vm527, %v347, 0.0
    %v1242 = vadd.f32 %v1240, %v1241
    %v1243 = vsel %vm527, %v348, 0.0
    %v1244 = vadd.f32 %v1242, %v1243
    %v1245 = vsel %vm527, %v349, 0.0
    %v1246 = vadd.f32 %v1244, %v1245
    %v1247 = vsel %vm527, %v350, 0.0
    %v1248 = vadd.f32 %v1246, %v1247
    %v1249 = vsel %vm527, %v351, 0.0
    %v1250 = vadd.f32 %v1248, %v1249
    %v1251 = vsel %vm527, %v352, 0.0
    %v1252 = vadd.f32 %v1250, %v1251
    %v1253 = vsel %vm527, %v353, 0.0
    %v1254 = vadd.f32 %v1252, %v1253
    %v1255 = vsel %vm527, %v354, 0.0
    %v1256 = vadd.f32 %v1254, %v1255
    %v1257 = vsel %vm527, %v355, 0.0
    %v1258 = vadd.f32 %v1256, %v1257
    %v1259 = vsel %vm527, %v356, 0.0
    %v1260 = vadd.f32 %v1258, %v1259
    %v1261 = vsel %vm527, %v357, 0.0
    %v1262 = vadd.f32 %v1260, %v1261
    %v1263 = vsel %vm527, %v358, 0.0
    %v1264 = vadd.f32 %v1262, %v1263
    %v1265 = vsel %vm527, %v359, 0.0
    %v1266 = vadd.f32 %v1264, %v1265
    %v1267 = vsel %vm527, %v360, 0.0
    %v1268 = vadd.f32 %v1266, %v1267
    %v1269 = vsel %vm527, %v361, 0.0
    %v1270 = vadd.f32 %v1268, %v1269
    %v1271 = vsel %vm527, %v362, 0.0
    %v1272 = vadd.f32 %v1270, %v1271
    %v1273 = vsel %vm527, %v363, 0.0
    %v1274 = vadd.f32 %v1272, %v1273
    %v1275 = vsel %vm527, %v364, 0.0
    %v1276 = vadd.f32 %v1274, %v1275
    %v1277 = vsel %vm527, %v365, 0.0
    %v1278 = vadd.f32 %v1276, %v1277
    %v1279 = vsel %vm527, %v366, 0.0
    %v1280 = vadd.f32 %v1278, %v1279
    %v1281 = vrot.slane %v1280, 4
    %v1282 = vadd.f32 %v1280, %v1281
    %v1283 = vrot.slane %v1282, 2
    %v1284 = vadd.f32 %v1282, %v1283
    %v1285 = vrot.slane %v1284, 1
    %v1286 = vadd.f32 %v1284, %v1285
    %v1287 = vsel %vm527, %v367, 0.0
    %v1288 = vsel %vm527, %v368, 0.0
    %v1289 = vadd.f32 %v1287, %v1288
    %v1290 = vsel %vm527, %v369, 0.0
    %v1291 = vadd.f32 %v1289, %v1290
    %v1292 = vsel %vm527, %v370, 0.0
    %v1293 = vadd.f32 %v1291, %v1292
    %v1294 = vsel %vm527, %v371, 0.0
    %v1295 = vadd.f32 %v1293, %v1294
    %v1296 = vsel %vm527, %v372, 0.0
    %v1297 = vadd.f32 %v1295, %v1296
    %v1298 = vsel %vm527, %v373, 0.0
    %v1299 = vadd.f32 %v1297, %v1298
    %v1300 = vsel %vm527, %v374, 0.0
    %v1301 = vadd.f32 %v1299, %v1300
    %v1302 = vsel %vm527, %v375, 0.0
    %v1303 = vadd.f32 %v1301, %v1302
    %v1304 = vsel %vm527, %v376, 0.0
    %v1305 = vadd.f32 %v1303, %v1304
    %v1306 = vsel %vm527, %v377, 0.0
    %v1307 = vadd.f32 %v1305, %v1306
    %v1308 = vsel %vm527, %v378, 0.0
    %v1309 = vadd.f32 %v1307, %v1308
    %v1310 = vsel %vm527, %v379, 0.0
    %v1311 = vadd.f32 %v1309, %v1310
    %v1312 = vsel %vm527, %v380, 0.0
    %v1313 = vadd.f32 %v1311, %v1312
    %v1314 = vsel %vm527, %v381, 0.0
    %v1315 = vadd.f32 %v1313, %v1314
    %v1316 = vsel %vm527, %v382, 0.0
    %v1317 = vadd.f32 %v1315, %v1316
    %v1318 = vsel %vm527, %v383, 0.0
    %v1319 = vadd.f32 %v1317, %v1318
    %v1320 = vsel %vm527, %v384, 0.0
    %v1321 = vadd.f32 %v1319, %v1320
    %v1322 = vsel %vm527, %v385, 0.0
    %v1323 = vadd.f32 %v1321, %v1322
    %v1324 = vsel %vm527, %v386, 0.0
    %v1325 = vadd.f32 %v1323, %v1324
    %v1326 = vsel %vm527, %v387, 0.0
    %v1327 = vadd.f32 %v1325, %v1326
    %v1328 = vsel %vm527, %v388, 0.0
    %v1329 = vadd.f32 %v1327, %v1328
    %v1330 = vsel %vm527, %v389, 0.0
    %v1331 = vadd.f32 %v1329, %v1330
    %v1332 = vsel %vm527, %v390, 0.0
    %v1333 = vadd.f32 %v1331, %v1332
    %v1334 = vsel %vm527, %v391, 0.0
    %v1335 = vadd.f32 %v1333, %v1334
    %v1336 = vsel %vm527, %v392, 0.0
    %v1337 = vadd.f32 %v1335, %v1336
    %v1338 = vsel %vm527, %v393, 0.0
    %v1339 = vadd.f32 %v1337, %v1338
    %v1340 = vsel %vm527, %v394, 0.0
    %v1341 = vadd.f32 %v1339, %v1340
    %v1342 = vsel %vm527, %v395, 0.0
    %v1343 = vadd.f32 %v1341, %v1342
    %v1344 = vsel %vm527, %v396, 0.0
    %v1345 = vadd.f32 %v1343, %v1344
    %v1346 = vsel %vm527, %v397, 0.0
    %v1347 = vadd.f32 %v1345, %v1346
    %v1348 = vsel %vm527, %v398, 0.0
    %v1349 = vadd.f32 %v1347, %v1348
    %v1350 = vrot.slane %v1349, 4
    %v1351 = vadd.f32 %v1349, %v1350
    %v1352 = vrot.slane %v1351, 2
    %v1353 = vadd.f32 %v1351, %v1352
    %v1354 = vrot.slane %v1353, 1
    %v1355 = vadd.f32 %v1353, %v1354
    %v1356 = vsel %vm527, %v399, 0.0
    %v1357 = vsel %vm527, %v400, 0.0
    %v1358 = vadd.f32 %v1356, %v1357
    %v1359 = vsel %vm527, %v401, 0.0
    %v1360 = vadd.f32 %v1358, %v1359
    %v1361 = vsel %vm527, %v402, 0.0
    %v1362 = vadd.f32 %v1360, %v1361
    %v1363 = vsel %vm527, %v403, 0.0
    %v1364 = vadd.f32 %v1362, %v1363
    %v1365 = vsel %vm527, %v404, 0.0
    %v1366 = vadd.f32 %v1364, %v1365
    %v1367 = vsel %vm527, %v405, 0.0
    %v1368 = vadd.f32 %v1366, %v1367
    %v1369 = vsel %vm527, %v406, 0.0
    %v1370 = vadd.f32 %v1368, %v1369
    %v1371 = vsel %vm527, %v407, 0.0
    %v1372 = vadd.f32 %v1370, %v1371
    %v1373 = vsel %vm527, %v408, 0.0
    %v1374 = vadd.f32 %v1372, %v1373
    %v1375 = vsel %vm527, %v409, 0.0
    %v1376 = vadd.f32 %v1374, %v1375
    %v1377 = vsel %vm527, %v410, 0.0
    %v1378 = vadd.f32 %v1376, %v1377
    %v1379 = vsel %vm527, %v411, 0.0
    %v1380 = vadd.f32 %v1378, %v1379
    %v1381 = vsel %vm527, %v412, 0.0
    %v1382 = vadd.f32 %v1380, %v1381
    %v1383 = vsel %vm527, %v413, 0.0
    %v1384 = vadd.f32 %v1382, %v1383
    %v1385 = vsel %vm527, %v414, 0.0
    %v1386 = vadd.f32 %v1384, %v1385
    %v1387 = vsel %vm527, %v415, 0.0
    %v1388 = vadd.f32 %v1386, %v1387
    %v1389 = vsel %vm527, %v416, 0.0
    %v1390 = vadd.f32 %v1388, %v1389
    %v1391 = vsel %vm527, %v417, 0.0
    %v1392 = vadd.f32 %v1390, %v1391
    %v1393 = vsel %vm527, %v418, 0.0
    %v1394 = vadd.f32 %v1392, %v1393
    %v1395 = vsel %vm527, %v419, 0.0
    %v1396 = vadd.f32 %v1394, %v1395
    %v1397 = vsel %vm527, %v420, 0.0
    %v1398 = vadd.f32 %v1396, %v1397
    %v1399 = vsel %vm527, %v421, 0.0
    %v1400 = vadd.f32 %v1398, %v1399
    %v1401 = vsel %vm527, %v422, 0.0
    %v1402 = vadd.f32 %v1400, %v1401
    %v1403 = vsel %vm527, %v423, 0.0
    %v1404 = vadd.f32 %v1402, %v1403
    %v1405 = vsel %vm527, %v424, 0.0
    %v1406 = vadd.f32 %v1404, %v1405
    %v1407 = vsel %vm527, %v425, 0.0
    %v1408 = vadd.f32 %v1406, %v1407
    %v1409 = vsel %vm527, %v426, 0.0
    %v1410 = vadd.f32 %v1408, %v1409
    %v1411 = vsel %vm527, %v427, 0.0
    %v1412 = vadd.f32 %v1410, %v1411
    %v1413 = vsel %vm527, %v428, 0.0
    %v1414 = vadd.f32 %v1412, %v1413
    %v1415 = vsel %vm527, %v429, 0.0
    %v1416 = vadd.f32 %v1414, %v1415
    %v1417 = vsel %vm527, %v430, 0.0
    %v1418 = vadd.f32 %v1416, %v1417
    %v1419 = vrot.slane %v1418, 4
    %v1420 = vadd.f32 %v1418, %v1419
    %v1421 = vrot.slane %v1420, 2
    %v1422 = vadd.f32 %v1420, %v1421
    %v1423 = vrot.slane %v1422, 1
    %v1424 = vadd.f32 %v1422, %v1423
    %v1425 = vsel %vm527, %v431, 0.0
    %v1426 = vsel %vm527, %v432, 0.0
    %v1427 = vadd.f32 %v1425, %v1426
    %v1428 = vsel %vm527, %v433, 0.0
    %v1429 = vadd.f32 %v1427, %v1428
    %v1430 = vsel %vm527, %v434, 0.0
    %v1431 = vadd.f32 %v1429, %v1430
    %v1432 = vsel %vm527, %v435, 0.0
    %v1433 = vadd.f32 %v1431, %v1432
    %v1434 = vsel %vm527, %v436, 0.0
    %v1435 = vadd.f32 %v1433, %v1434
    %v1436 = vsel %vm527, %v437, 0.0
    %v1437 = vadd.f32 %v1435, %v1436
    %v1438 = vsel %vm527, %v438, 0.0
    %v1439 = vadd.f32 %v1437, %v1438
    %v1440 = vsel %vm527, %v439, 0.0
    %v1441 = vadd.f32 %v1439, %v1440
    %v1442 = vsel %vm527, %v440, 0.0
    %v1443 = vadd.f32 %v1441, %v1442
    %v1444 = vsel %vm527, %v441, 0.0
    %v1445 = vadd.f32 %v1443, %v1444
    %v1446 = vsel %vm527, %v442, 0.0
    %v1447 = vadd.f32 %v1445, %v1446
    %v1448 = vsel %vm527, %v443, 0.0
    %v1449 = vadd.f32 %v1447, %v1448
    %v1450 = vsel %vm527, %v444, 0.0
    %v1451 = vadd.f32 %v1449, %v1450
    %v1452 = vsel %vm527, %v445, 0.0
    %v1453 = vadd.f32 %v1451, %v1452
    %v1454 = vsel %vm527, %v446, 0.0
    %v1455 = vadd.f32 %v1453, %v1454
    %v1456 = vsel %vm527, %v447, 0.0
    %v1457 = vadd.f32 %v1455, %v1456
    %v1458 = vsel %vm527, %v448, 0.0
    %v1459 = vadd.f32 %v1457, %v1458
    %v1460 = vsel %vm527, %v449, 0.0
    %v1461 = vadd.f32 %v1459, %v1460
    %v1462 = vsel %vm527, %v450, 0.0
    %v1463 = vadd.f32 %v1461, %v1462
    %v1464 = vsel %vm527, %v451, 0.0
    %v1465 = vadd.f32 %v1463, %v1464
    %v1466 = vsel %vm527, %v452, 0.0
    %v1467 = vadd.f32 %v1465, %v1466
    %v1468 = vsel %vm527, %v453, 0.0
    %v1469 = vadd.f32 %v1467, %v1468
    %v1470 = vsel %vm527, %v454, 0.0
    %v1471 = vadd.f32 %v1469, %v1470
    %v1472 = vsel %vm527, %v455, 0.0
    %v1473 = vadd.f32 %v1471, %v1472
    %v1474 = vsel %vm527, %v456, 0.0
    %v1475 = vadd.f32 %v1473, %v1474
    %v1476 = vsel %vm527, %v457, 0.0
    %v1477 = vadd.f32 %v1475, %v1476
    %v1478 = vsel %vm527, %v458, 0.0
    %v1479 = vadd.f32 %v1477, %v1478
    %v1480 = vsel %vm527, %v459, 0.0
    %v1481 = vadd.f32 %v1479, %v1480
    %v1482 = vsel %vm527, %v460, 0.0
    %v1483 = vadd.f32 %v1481, %v1482
    %v1484 = vsel %vm527, %v461, 0.0
    %v1485 = vadd.f32 %v1483, %v1484
    %v1486 = vsel %vm527, %v462, 0.0
    %v1487 = vadd.f32 %v1485, %v1486
    %v1488 = vrot.slane %v1487, 4
    %v1489 = vadd.f32 %v1487, %v1488
    %v1490 = vrot.slane %v1489, 2
    %v1491 = vadd.f32 %v1489, %v1490
    %v1492 = vrot.slane %v1491, 1
    %v1493 = vadd.f32 %v1491, %v1492
    %v1494 = vsel %vm527, %v463, 0.0
    %v1495 = vsel %vm527, %v464, 0.0
    %v1496 = vadd.f32 %v1494, %v1495
    %v1497 = vsel %vm527, %v465, 0.0
    %v1498 = vadd.f32 %v1496, %v1497
    %v1499 = vsel %vm527, %v466, 0.0
    %v1500 = vadd.f32 %v1498, %v1499
    %v1501 = vsel %vm527, %v467, 0.0
    %v1502 = vadd.f32 %v1500, %v1501
    %v1503 = vsel %vm527, %v468, 0.0
    %v1504 = vadd.f32 %v1502, %v1503
    %v1505 = vsel %vm527, %v469, 0.0
    %v1506 = vadd.f32 %v1504, %v1505
    %v1507 = vsel %vm527, %v470, 0.0
    %v1508 = vadd.f32 %v1506, %v1507
    %v1509 = vsel %vm527, %v471, 0.0
    %v1510 = vadd.f32 %v1508, %v1509
    %v1511 = vsel %vm527, %v472, 0.0
    %v1512 = vadd.f32 %v1510, %v1511
    %v1513 = vsel %vm527, %v473, 0.0
    %v1514 = vadd.f32 %v1512, %v1513
    %v1515 = vsel %vm527, %v474, 0.0
    %v1516 = vadd.f32 %v1514, %v1515
    %v1517 = vsel %vm527, %v475, 0.0
    %v1518 = vadd.f32 %v1516, %v1517
    %v1519 = vsel %vm527, %v476, 0.0
    %v1520 = vadd.f32 %v1518, %v1519
    %v1521 = vsel %vm527, %v477, 0.0
    %v1522 = vadd.f32 %v1520, %v1521
    %v1523 = vsel %vm527, %v478, 0.0
    %v1524 = vadd.f32 %v1522, %v1523
    %v1525 = vsel %vm527, %v479, 0.0
    %v1526 = vadd.f32 %v1524, %v1525
    %v1527 = vsel %vm527, %v480, 0.0
    %v1528 = vadd.f32 %v1526, %v1527
    %v1529 = vsel %vm527, %v481, 0.0
    %v1530 = vadd.f32 %v1528, %v1529
    %v1531 = vsel %vm527, %v482, 0.0
    %v1532 = vadd.f32 %v1530, %v1531
    %v1533 = vsel %vm527, %v483, 0.0
    %v1534 = vadd.f32 %v1532, %v1533
    %v1535 = vsel %vm527, %v484, 0.0
    %v1536 = vadd.f32 %v1534, %v1535
    %v1537 = vsel %vm527, %v485, 0.0
    %v1538 = vadd.f32 %v1536, %v1537
    %v1539 = vsel %vm527, %v486, 0.0
    %v1540 = vadd.f32 %v1538, %v1539
    %v1541 = vsel %vm527, %v487, 0.0
    %v1542 = vadd.f32 %v1540, %v1541
    %v1543 = vsel %vm527, %v488, 0.0
    %v1544 = vadd.f32 %v1542, %v1543
    %v1545 = vsel %vm527, %v489, 0.0
    %v1546 = vadd.f32 %v1544, %v1545
    %v1547 = vsel %vm527, %v490, 0.0
    %v1548 = vadd.f32 %v1546, %v1547
    %v1549 = vsel %vm527, %v491, 0.0
    %v1550 = vadd.f32 %v1548, %v1549
    %v1551 = vsel %vm527, %v492, 0.0
    %v1552 = vadd.f32 %v1550, %v1551
    %v1553 = vsel %vm527, %v493, 0.0
    %v1554 = vadd.f32 %v1552, %v1553
    %v1555 = vsel %vm527, %v494, 0.0
    %v1556 = vadd.f32 %v1554, %v1555
    %v1557 = vrot.slane %v1556, 4
    %v1558 = vadd.f32 %v1556, %v1557
    %v1559 = vrot.slane %v1558, 2
    %v1560 = vadd.f32 %v1558, %v1559
    %v1561 = vrot.slane %v1560, 1
    %v1562 = vadd.f32 %v1560, %v1561
    %v1563 = vsel %vm527, %v495, 0.0
    %v1564 = vsel %vm527, %v496, 0.0
    %v1565 = vadd.f32 %v1563, %v1564
    %v1566 = vsel %vm527, %v497, 0.0
    %v1567 = vadd.f32 %v1565, %v1566
    %v1568 = vsel %vm527, %v498, 0.0
    %v1569 = vadd.f32 %v1567, %v1568
    %v1570 = vsel %vm527, %v499, 0.0
    %v1571 = vadd.f32 %v1569, %v1570
    %v1572 = vsel %vm527, %v500, 0.0
    %v1573 = vadd.f32 %v1571, %v1572
    %v1574 = vsel %vm527, %v501, 0.0
    %v1575 = vadd.f32 %v1573, %v1574
    %v1576 = vsel %vm527, %v502, 0.0
    %v1577 = vadd.f32 %v1575, %v1576
    %v1578 = vsel %vm527, %v503, 0.0
    %v1579 = vadd.f32 %v1577, %v1578
    %v1580 = vsel %vm527, %v504, 0.0
    %v1581 = vadd.f32 %v1579, %v1580
    %v1582 = vsel %vm527, %v505, 0.0
    %v1583 = vadd.f32 %v1581, %v1582
    %v1584 = vsel %vm527, %v506, 0.0
    %v1585 = vadd.f32 %v1583, %v1584
    %v1586 = vsel %vm527, %v507, 0.0
    %v1587 = vadd.f32 %v1585, %v1586
    %v1588 = vsel %vm527, %v508, 0.0
    %v1589 = vadd.f32 %v1587, %v1588
    %v1590 = vsel %vm527, %v509, 0.0
    %v1591 = vadd.f32 %v1589, %v1590
    %v1592 = vsel %vm527, %v510, 0.0
    %v1593 = vadd.f32 %v1591, %v1592
    %v1594 = vsel %vm527, %v511, 0.0
    %v1595 = vadd.f32 %v1593, %v1594
    %v1596 = vsel %vm527, %v512, 0.0
    %v1597 = vadd.f32 %v1595, %v1596
    %v1598 = vsel %vm527, %v513, 0.0
    %v1599 = vadd.f32 %v1597, %v1598
    %v1600 = vsel %vm527, %v514, 0.0
    %v1601 = vadd.f32 %v1599, %v1600
    %v1602 = vsel %vm527, %v515, 0.0
    %v1603 = vadd.f32 %v1601, %v1602
    %v1604 = vsel %vm527, %v516, 0.0
    %v1605 = vadd.f32 %v1603, %v1604
    %v1606 = vsel %vm527, %v517, 0.0
    %v1607 = vadd.f32 %v1605, %v1606
    %v1608 = vsel %vm527, %v518, 0.0
    %v1609 = vadd.f32 %v1607, %v1608
    %v1610 = vsel %vm527, %v519, 0.0
    %v1611 = vadd.f32 %v1609, %v1610
    %v1612 = vsel %vm527, %v520, 0.0
    %v1613 = vadd.f32 %v1611, %v1612
    %v1614 = vsel %vm527, %v521, 0.0
    %v1615 = vadd.f32 %v1613, %v1614
    %v1616 = vsel %vm527, %v522, 0.0
    %v1617 = vadd.f32 %v1615, %v1616
    %v1618 = vsel %vm527, %v523, 0.0
    %v1619 = vadd.f32 %v1617, %v1618
    %v1620 = vsel %vm527, %v524, 0.0
    %v1621 = vadd.f32 %v1619, %v1620
    %v1622 = vsel %vm527, %v525, 0.0
    %v1623 = vadd.f32 %v1621, %v1622
    %v1624 = vsel %vm527, %v526, 0.0
    %v1625 = vadd.f32 %v1623, %v1624
    %v1626 = vrot.slane %v1625, 4
    %v1627 = vadd.f32 %v1625, %v1626
    %v1628 = vrot.slane %v1627, 2
    %v1629 = vadd.f32 %v1627, %v1628
    %v1630 = vrot.slane %v1629, 1
    %v1631 = vadd.f32 %v1629, %v1630
    %v1632 = vmul.f32 %v596, 0.00390625
    %v1633 = vmul.f32 %v665, 0.00390625
    %v1634 = vmul.f32 %v734, 0.00390625
    %v1635 = vmul.f32 %v803, 0.00390625
    %v1636 = vmul.f32 %v872, 0.00390625
    %v1637 = vmul.f32 %v941, 0.00390625
    %v1638 = vmul.f32 %v1010, 0.00390625
    %v1639 = vmul.f32 %v1079, 0.00390625
    %v1640 = vmul.f32 %v1148, 0.00390625
    %v1641 = vmul.f32 %v1217, 0.00390625
    %v1642 = vmul.f32 %v1286, 0.00390625
    %v1643 = vmul.f32 %v1355, 0.00390625
    %v1644 = vmul.f32 %v1424, 0.00390625
    %v1645 = vmul.f32 %v1493, 0.00390625
    %v1646 = vmul.f32 %v1562, 0.00390625
    %v1647 = vmul.f32 %v1631, 0.00390625
    %v1648 = vld [vmem:[%s1] sm:$0xf]
    %v1649 = vld [vmem:[%s2] sm:$0x1]
    %v1651 = vlaneseq
    %v1652 = vshrl.u32 %v1651, 7
    %v1653 = vsub.s32 0, %v1652
    %v1654 = vrot.slane %v1649, %v1653
    %vm1672 = vcmask 1041409
    %v1673 = vsel %vm1672, %v1633, %v1632
    %vm1674 = vcmask 1042434
    %v1675 = vsel %vm1674, %v1634, %v1673
    %vm1676 = vcmask 1043459
    %v1677 = vsel %vm1676, %v1635, %v1675
    %vm1678 = vcmask 1044484
    %v1679 = vsel %vm1678, %v1636, %v1677
    %vm1680 = vcmask 1045509
    %v1681 = vsel %vm1680, %v1637, %v1679
    %vm1682 = vcmask 1046534
    %v1683 = vsel %vm1682, %v1638, %v1681
    %vm1684 = vcmask 1047559
    %v1685 = vsel %vm1684, %v1639, %v1683
    %v1686 = vsel %vm1672, %v1641, %v1640
    %v1687 = vsel %vm1674, %v1642, %v1686
    %v1688 = vsel %vm1676, %v1643, %v1687
    %v1689 = vsel %vm1678, %v1644, %v1688
    %v1690 = vsel %vm1680, %v1645, %v1689
    %v1691 = vsel %vm1682, %v1646, %v1690
    %v1692 = vsel %vm1684, %v1647, %v1691
    %v1693 = vsel %vm527, %v1685, 0
    %v1695 = vsel %vm527, %v1692, 0
    %vm1697 = vcmask 1043456
    %v1699 = vsel %vm1697, %v1648, 0
    %1701 = vmatprep.subr.mxu0 0.0
    %1702 = vmatpush1.msra.mxu0 %v1699
    %1703 = vmatprep.subr.mxu0 0.0
    %1704 = vmatpush1.msra.mxu0 0.0
    %1705 = vmatprep.subr.mxu0 0.0
    %1706 = vmatpush1.msra.mxu0 0.0
    %1707 = vmatprep.subr.mxu0 0.0
    %1708 = vmatpush1.msra.mxu0 0.0
    %1709 = vmatprep.subr.mxu0 0.0
    %1710 = vmatpush1.msra.mxu0 0.0
    %1711 = vmatprep.subr.mxu0 0.0
    %1712 = vmatpush1.msra.mxu0 0.0
    %1713 = vmatprep.subr.mxu0 0.0
    %1714 = vmatpush1.msra.mxu0 0.0
    %1715 = vmatprep.subr.mxu0 0.0
    %1716 = vmatpush1.msra.mxu0 0.0
    %1717 = vmatprep.subr.mxu0 0.0
    %1718 = vmatpush1.msra.mxu0 0.0
    %1719 = vmatprep.subr.mxu0 0.0
    %1720 = vmatpush1.msra.mxu0 0.0
    %1721 = vmatprep.subr.mxu0 0.0
    %1722 = vmatpush1.msra.mxu0 0.0
    %1723 = vmatprep.subr.mxu0 0.0
    %1724 = vmatpush1.msra.mxu0 0.0
    %1725 = vmatprep.subr.mxu0 0.0
    %1726 = vmatpush1.msra.mxu0 0.0
    %1727 = vmatprep.subr.mxu0 0.0
    %1728 = vmatpush1.msra.mxu0 0.0
    %1729 = vmatprep.subr.mxu0 0.0
    %1730 = vmatpush1.msra.mxu0 0.0
    %1731 = vmatprep.subr.mxu0 0.0
    %1732 = vmatpush1.msra.mxu0 0.0
    %1733 = vmatprep.subr.mxu0 0.0
    %1734 = vmatpush1.msra.mxu0 0.0
    %1735 = vmatprep.subr.mxu0 0.0
    %1736 = vmatpush1.msra.mxu0 0.0
    %1737 = vmatprep.subr.mxu0 0.0
    %1738 = vmatpush1.msra.mxu0 0.0
    %1739 = vmatprep.subr.mxu0 0.0
    %1740 = vmatpush1.msra.mxu0 0.0
    %1741 = vmatprep.subr.mxu0 0.0
    %1742 = vmatpush1.msra.mxu0 0.0
    %1743 = vmatprep.subr.mxu0 0.0
    %1744 = vmatpush1.msra.mxu0 0.0
    %1745 = vmatprep.subr.mxu0 0.0
    %1746 = vmatpush1.msra.mxu0 0.0
    %1747 = vmatprep.subr.mxu0 0.0
    %1748 = vmatpush1.msra.mxu0 0.0
    %1749 = vmatprep.subr.mxu0 0.0
    %1750 = vmatpush1.msra.mxu0 0.0
    %1751 = vmatprep.subr.mxu0 0.0
    %1752 = vmatpush1.msra.mxu0 0.0
    %1753 = vmatprep.subr.mxu0 0.0
    %1754 = vmatpush1.msra.mxu0 0.0
    %1755 = vmatprep.subr.mxu0 0.0
    %1756 = vmatpush1.msra.mxu0 0.0
    %1757 = vmatprep.subr.mxu0 0.0
    %1758 = vmatpush1.msra.mxu0 0.0
    %1759 = vmatprep.subr.mxu0 0.0
    %1760 = vmatpush1.msra.mxu0 0.0
    %1761 = vmatprep.subr.mxu0 0.0
    %1762 = vmatpush1.msra.mxu0 0.0
    %1763 = vmatprep.subr.mxu0 0.0
    %1764 = vmatpush1.msra.mxu0 0.0
    %1765 = vmatprep.mubr.f32.mxu0 0.0
    %1766 = vmatmul.mubr.f32.gmra.mrb[0].mxu0 %v1693
    %v1767 = vpop.f32.mrb[0].mxu0
    %v1768 = vadd.f32 %v1654, %v1767
    %v1769 = vpop.f32.mrb[0].mxu0
    %1770 = vmatprep.mubr.f32.mxu0 0.0
    %1771 = vmatmul.mubr.f32.gmra.mrb[0].mxu0 %v1695
    %v1772 = vpop.f32.mrb[0].mxu0
    %v1773 = vadd.f32 %v1654, %v1772
    %v1774 = vpop.f32.mrb[0].mxu0
    %1775 = vdwg.mxu0
    %v1776 = vmax.f32 %v1768, 0.0
    %v1777 = vmax.f32 %v1773, 0.0
    %1778 = vst [vmem:[#allocation2] sm:$0xff] %v1776
    %1779 = vst [vmem:[#allocation2 + $0x8] sm:$0xff] %v1777
    // Predicated region
    $region14: #{tpu_custom_call.1} parent=1 // pred_check
      _
    $region15: #{tpu_custom_call.1} parent=1 // pred_check_branch
      %1781 = sbr.rel (0) target = $region17
    $region16: #{tpu_custom_call.1} parent=1 // pred_region
      %s1783 = ssub.s32 256, 256
      %1784 = vsyncadd [#allocation3], %s1783
      %s1785 = sshll.u32 [#allocation2], 4
      %s1786 = int_to_ptr.vmem [resolvable:$true] %s1785
      %1791 = dma.vmem_to_hbm [thread:$0]  %s1786, 256, %s3, [#allocation3], 128, 128, 8
    $region17: #{tpu_custom_call.1} parent=1 // pred_fallthru
      _
    // Predicated region
    $region18: #{tpu_custom_call.1} parent=1 // pred_check
      _
    $region19: #{tpu_custom_call.1} parent=1 // pred_check_branch
      %1793 = sbr.rel (0) target = $region21
    $region20: #{tpu_custom_call.1} parent=1 // pred_region
      %1794 = dma.done [#allocation3], 256
    $region21: #{tpu_custom_call.1} parent=1 // pred_fallthru
      _
    %1795 = vsyncpa [#allocation3], 1

</llo_original>
